<compile_context>
chip_gen: v7x
topology: tpu7x:2x2x1
jax: 0.10.0
libtpu: 0.0.40
codegen_flags: <defaults>
</compile_context>

<pallas_src>
import jax
import jax.numpy as jnp
from jax import lax
from jax.experimental import pallas as pl
from jax.experimental.pallas import tpu as pltpu

SIGMA = 1.0
EPS = 1e-6


def _make_heat_pool_kernel(tile_t, steps_per_split, t_real, needs_mask, sigma):
    """Builds the streamed heat-pooling kernel (closed over static tiling params)."""
    half_inv_sig2 = 0.5 / (sigma * sigma)

    def kernel(m_ref, x_ref, num_out, den_out, max_out, num_sc, den_sc, max_sc):
        t = pl.program_id(1)

        @pl.when(t == 0)
        def _init():
            num_sc[...] = jnp.zeros_like(num_sc)
            den_sc[...] = jnp.zeros_like(den_sc)
            max_sc[...] = jnp.full_like(max_sc, -jnp.inf)

        x = x_ref[...]                      # (C, Tt)  native dtype (f32 or bf16) -> MXU feed
        m = m_ref[...]                      # (K, C)   same dtype as x
        x32 = x.astype(jnp.float32)         # f32 copy only for elementwise math

        # logits: s[k,t] = (2<m_k, x_t> - ||x_t||^2) / (2 sigma^2)
        # The per-k constant ||m_k||^2 is dropped - it cancels exactly in the final
        # normalization, just like the running-max shift (no clamp needed either).
        cross = lax.dot_general(m, x, (((1,), (0,)), ((), ())),
                                preferred_element_type=jnp.float32)     # (K, Tt)  MXU
        xsq = jnp.sum(x32 * x32, axis=0, keepdims=True)                 # (1, Tt)  XLU
        s = (2.0 * cross - xsq) * half_inv_sig2                         # (K, Tt)  VPU

        if needs_mask:
            # Zero-padded tail columns must not contribute to the softmax.
            col0 = (pl.program_id(0) * steps_per_split + t) * tile_t
            lane = lax.broadcasted_iota(jnp.int32, (1, tile_t), 1)
            s = jnp.where(col0 + lane < t_real, s, -jnp.inf)

        # Flash-style online stabilization over the streamed T axis.
        m_new = jnp.maximum(max_sc[...], jnp.max(s, axis=-1, keepdims=True))   # (K, 1)
        alpha = jnp.exp(max_sc[...] - m_new)                                   # (K, 1)
        w = jnp.exp(s - m_new)                                                 # (K, Tt) EUP

        den_sc[...] = alpha * den_sc[...] + jnp.sum(w, axis=-1, keepdims=True)
        # Numerator accumulated as (C, K): contract on the lane (T) axis of x so the big
        # (C, Tt) tile feeds the MXU without an XLU relayout; only the small (K, Tt)
        # weight operand gets re-laid out.
        num_sc[...] = num_sc[...] * jnp.transpose(alpha, (1, 0)) + lax.dot_general(
            x, w.astype(x.dtype), (((1,), (1,)), ((), ())),
            preferred_element_type=jnp.float32)                                # (C, K)
        max_sc[...] = m_new

        @pl.when(t == pl.num_programs(1) - 1)
        def _finalize():
            # Emit per-split partial statistics; combined cheaply in the wrapper.
            num_out[...] = jnp.transpose(num_sc[...], (1, 0))   # (K, C) - tiny transpose, once
            den_out[...] = den_sc[...]                          # (K, 1)
            max_out[...] = max_sc[...]                          # (K, 1)

    return kernel


def _vmem_budget_bytes():
    """Per-generation VMEM budget with headroom (~48 MiB v7x, ~96 MiB v5e/v6e)."""
    try:
        cap = pltpu.get_tpu_info().vmem_capacity_bytes
    except Exception:
        cap = 64 * 1024 * 1024          # conservative fallback (v7x per-TC VMEM)
    return int(cap) * 3 // 4


def _pick_tile_t(T, C, K, x_itemsize, budget, max_tile_t=None):
    """Largest lane-aligned T tile that fits the VMEM budget (x is triple-buffered)."""
    fixed = 4 * (3 * K * C + 6 * K) + 2 * K * C * x_itemsize   # means/outputs/scratch (tiny)
    per_t = 3 * C * x_itemsize                                  # Buffered(3) x tiles
    cap = max((budget - fixed) // per_t, 128)
    cap = int(cap) // 128 * 128
    if max_tile_t is not None:
        cap = min(cap, max(128, int(max_tile_t) // 128 * 128))
    cap = min(cap, max(-(-T // 128) * 128, 128))                # never beyond round_up(T,128)
    # Fast path: an exactly-dividing lane-aligned tile needs no padding / masking.
    for cand in (65536, 32768, 16384, 8192, 4096, 2048, 1024, 512, 256, 128):
        if cand <= cap and T % cand == 0:
            return cand
    # Ragged T: biggest aligned tile; wrapper zero-pads and the kernel lane-masks.
    return cap


def hew_forward(x_nct, means, *, sigma=SIGMA, max_tile_t=None):
    """Heat-kernel weighted pooling (Pallas TPU).

    x_nct: (1, C, T) activations as fed to the PyTorch module (float32 or bfloat16).
    means: (K, C)    precomputed means (stand-in for the joblib-loaded self.mean).
    Returns (K, C) float32, i.e. LF.weight_Heat applied to the (T, C) view of x.
    The PyTorch (1, C, T) -> (T, C) transpose is folded into the kernel layout
    (x is consumed as (C, T) with time on the 128-lane axis): no extra HBM pass.
    """
    assert x_nct.shape[0] == 1, "Hew.forward squeezes a leading batch dim of 1"
    x_ct = x_nct[0]                                   # (C, T): pure squeeze, no transpose copy
    C, T = x_ct.shape
    K, Cm = means.shape
    assert Cm == C, "means must have the same channel dim as x"

    means = means.astype(x_ct.dtype)                  # single dtype into the MXU (bf16-friendly)
    x_itemsize = jnp.dtype(x_ct.dtype).itemsize

    budget = _vmem_budget_bytes()
    tile_t = _pick_tile_t(T, C, K, x_itemsize, budget, max_tile_t)

    steps = pl.cdiv(T, tile_t)
    # Split the T reduction across 2 resident program instances: the "parallel" leading
    # axis is sharded across v7x's 2 TensorCores (~2x for long T); on v5e/v6e (1 TC) it is
    # just two sequential halves with negligible overhead.
    num_splits = 2 if steps >= 2 else 1
    steps_per_split = pl.cdiv(steps, num_splits)
    padded_t = num_splits * steps_per_split * tile_t
    needs_mask = padded_t != T
    if needs_mask:
        # Zero-pad the ragged tail (one extra HBM pass only in the non-aligned case) so edge
        # blocks never read unspecified data; padded columns are masked out in-kernel.
        x_ct = jnp.pad(x_ct, ((0, 0), (0, padded_t - T)))

    kernel = _make_heat_pool_kernel(tile_t, steps_per_split, T, needs_mask, sigma)
    x_pipe = pl.Buffered(3) if steps_per_split >= 3 else None

    num_p, den_p, max_p = pl.pallas_call(
        kernel,
        out_shape=(
            jax.ShapeDtypeStruct((num_splits, K, C), jnp.float32),
            jax.ShapeDtypeStruct((num_splits, K, 1), jnp.float32),
            jax.ShapeDtypeStruct((num_splits, K, 1), jnp.float32),
        ),
        grid_spec=pltpu.PrefetchScalarGridSpec(
            num_scalar_prefetch=0,
            grid=(num_splits, steps_per_split),
            in_specs=[
                pl.BlockSpec((K, C), lambda c, t: (0, 0)),                   # means: tiny, revisited
                pl.BlockSpec((C, tile_t),
                             lambda c, t: (0, c * steps_per_split + t),
                             pipeline_mode=x_pipe),                          # x streamed over T
            ],
            out_specs=[
                pl.BlockSpec((None, K, C), lambda c, t: (c, 0, 0)),          # per-split partial num
                pl.BlockSpec((None, K, 1), lambda c, t: (c, 0, 0)),          # per-split partial den
                pl.BlockSpec((None, K, 1), lambda c, t: (c, 0, 0)),          # per-split running max
            ],
            scratch_shapes=[
                pltpu.VMEM((C, K), jnp.float32),   # numerator accumulator (C, K)
                pltpu.VMEM((K, 1), jnp.float32),   # denominator accumulator
                pltpu.VMEM((K, 1), jnp.float32),   # running max (stabilization)
            ],
        ),
        compiler_params=pltpu.CompilerParams(
            dimension_semantics=("parallel", "arbitrary"),   # split axis || ; T axis = reduction
            vmem_limit_bytes=budget,
        ),
    )(means, x_ct)

    # Tiny cross-split combine (<= 2*K*(C+2) floats): global max, rescale, normalize.
    gmax = jnp.max(max_p, axis=0, keepdims=True)          # (1, K, 1)
    scale = jnp.exp(max_p - gmax)                         # (S, K, 1)
    den = jnp.sum(scale * den_p, axis=0)                  # (K, 1)
    num = jnp.sum(scale * num_p, axis=0)                  # (K, C)
    return num / (den + EPS)


def _reference(x_nct, means, sigma=SIGMA):
    x = jnp.transpose(x_nct[0].astype(jnp.float32), (1, 0))          # (T, C)
    m = means.astype(jnp.float32)
    d = jnp.sum((x[:, None, :] - m[None, :, :]) ** 2, axis=-1)       # (T, K)
    s = -d / (2.0 * sigma * sigma)
    s = s - jnp.max(s, axis=0, keepdims=True)                        # cancels in normalization
    w = jnp.exp(s)
    wn = w / (jnp.sum(w, axis=0, keepdims=True) + EPS)
    return wn.T @ x                                                  # (K, C)


if __name__ == "__main__":
    key = jax.random.PRNGKey(0)
    kx, km, kx2, km2 = jax.random.split(key, 4)

    # Deterministic stand-in for the joblib-loaded means (self.mean), shape (K, C).
    C, T, K = 32, 2048, 8
    x = jax.random.normal(kx, (1, C, T), dtype=jnp.float32)          # PyTorch-style (1, C, T)
    means = jax.random.normal(km, (K, C), dtype=jnp.float32)
    ref = _reference(x, means)

    # 1) Default VMEM-budget tiling (single large lane-aligned tile).
    out = jax.block_until_ready(hew_forward(x, means))
    assert out.shape == (K, C)
    assert jnp.allclose(out, ref, atol=1e-3, rtol=1e-3), (
        f"f32 mismatch, max abs err = {jnp.max(jnp.abs(out - ref))}")

    # 2) Forced multi-step streaming + dual-split + ragged-T (zero-pad + lane mask) path.
    C2, T2 = 16, 1000                                                # T2 not a multiple of 128
    x2 = jax.random.normal(kx2, (1, C2, T2), dtype=jnp.float32)
    means2 = jax.random.normal(km2, (K, C2), dtype=jnp.float32)
    out2 = jax.block_until_ready(hew_forward(x2, means2, max_tile_t=256))
    ref2 = _reference(x2, means2)
    assert jnp.allclose(out2, ref2, atol=1e-3, rtol=1e-3), (
        f"ragged-T mismatch, max abs err = {jnp.max(jnp.abs(out2 - ref2))}")

    # 3) bf16 activations (halved HBM traffic on the only large operand; f32 softmax math).
    xb = x.astype(jnp.bfloat16)
    mb = means.astype(jnp.bfloat16)
    out_b = jax.block_until_ready(hew_forward(xb, mb, max_tile_t=512))
    ref_b = _reference(xb, mb)
    assert jnp.allclose(out_b, ref_b, atol=5e-2, rtol=5e-2), (
        f"bf16 mismatch, max abs err = {jnp.max(jnp.abs(out_b - ref_b))}")

    print("KERNEL_OK")
</pallas_src>

<mosaic_0001>
module attributes {stable_mosaic.version = 11 : i64} {
  func.func @kernel(%arg0: i32, %arg1: i32, %arg2: memref<8x32xf32, #tpu.memory_space<vmem>>, %arg3: memref<32x2048xf32, #tpu.memory_space<vmem>>, %arg4: memref<1x8x32xf32, #tpu.memory_space<vmem>>, %arg5: memref<1x8x1xf32, #tpu.memory_space<vmem>>, %arg6: memref<1x8x1xf32, #tpu.memory_space<vmem>>, %arg7: memref<32x8xf32, #tpu.memory_space<vmem>>, %arg8: memref<8x1xf32, #tpu.memory_space<vmem>>, %arg9: memref<8x1xf32, #tpu.memory_space<vmem>>) attributes {dimension_semantics = [#tpu.dimension_semantics<parallel>, #tpu.dimension_semantics<arbitrary>], iteration_bounds = array<i64: 1, 1>, scalar_prefetch = 0 : i64, scratch_operands = 3 : i64, tpu.core_type = #tpu.core_type<tc>, window_params = [{pipeline_mode = #tpu.pipeline_mode<synchronous>, transform_indices = @transform_0, window_bounds = array<i64: 8, 32>}, {transform_indices = @transform_1, window_bounds = array<i64: 32, 2048>}, {transform_indices = @transform_2, window_bounds = array<i64: 1, 8, 32>}, {transform_indices = @transform_3, window_bounds = array<i64: 1, 8, 1>}, {transform_indices = @transform_4, window_bounds = array<i64: 1, 8, 1>}]} {
    %c0_i32 = arith.constant 0 : i32
    %0 = arith.cmpi eq, %arg1, %c0_i32 : i32
    %1 = arith.extui %0 : i1 to i32
    %c0_i32_0 = arith.constant 0 : i32
    %2 = arith.cmpi ne, %1, %c0_i32_0 : i32
    scf.if %2 {
      %cst_26 = arith.constant 0.000000e+00 : f32
      %42 = vector.broadcast %cst_26 : f32 to vector<32x8xf32>
      %c0_27 = arith.constant 0 : index
      %c0_28 = arith.constant 0 : index
      %43 = vector.load %arg7[%c0_27, %c0_28] : memref<32x8xf32, #tpu.memory_space<vmem>>, vector<32x8xf32>
      tpu.vector_store %arg7[%c0_27, %c0_28], %42 {strides = array<i32>} : memref<32x8xf32, #tpu.memory_space<vmem>>, vector<32x8xf32>,
      %cst_29 = arith.constant 0.000000e+00 : f32
      %44 = vector.broadcast %cst_29 : f32 to vector<8x1xf32>
      %c0_30 = arith.constant 0 : index
      %c0_31 = arith.constant 0 : index
      %45 = vector.load %arg8[%c0_30, %c0_31] : memref<8x1xf32, #tpu.memory_space<vmem>>, vector<8x1xf32>
      tpu.vector_store %arg8[%c0_30, %c0_31], %44 {strides = array<i32>} : memref<8x1xf32, #tpu.memory_space<vmem>>, vector<8x1xf32>,
      %cst_32 = arith.constant 0xFF800000 : f32
      %46 = vector.broadcast %cst_32 : f32 to vector<8x1xf32>
      %c0_33 = arith.constant 0 : index
      %c0_34 = arith.constant 0 : index
      %47 = vector.load %arg9[%c0_33, %c0_34] : memref<8x1xf32, #tpu.memory_space<vmem>>, vector<8x1xf32>
      tpu.vector_store %arg9[%c0_33, %c0_34], %46 {strides = array<i32>} : memref<8x1xf32, #tpu.memory_space<vmem>>, vector<8x1xf32>,
    } else {
    }
    %c0 = arith.constant 0 : index
    %c0_1 = arith.constant 0 : index
    %3 = vector.load %arg3[%c0, %c0_1] : memref<32x2048xf32, #tpu.memory_space<vmem>>, vector<32x2048xf32>
    %c0_2 = arith.constant 0 : index
    %c0_3 = arith.constant 0 : index
    %4 = vector.load %arg2[%c0_2, %c0_3] : memref<8x32xf32, #tpu.memory_space<vmem>>, vector<8x32xf32>
    %cst = arith.constant dense<0.000000e+00> : vector<8x2048xf32>
    %5 = tpu.matmul %4, %3, %cst {dimension_numbers = #tpu.dot_dimension_numbers<[1], [0], [0], [1], [0, 0, 1, 1], [], []>} : vector<8x32xf32>, vector<32x2048xf32>, vector<8x2048xf32> -> vector<8x2048xf32>
    %6 = arith.mulf %3, %3 : vector<32x2048xf32>
    %cst_4 = arith.constant dense<0.000000e+00> : vector<2048xf32>
    %7 = vector.multi_reduction <add>, %6, %cst_4 [0] : vector<32x2048xf32> to vector<2048xf32>
    %8 = vector.shape_cast %7 : vector<2048xf32> to vector<1x2048xf32>
    %cst_5 = arith.constant 2.000000e+00 : f32
    %9 = vector.broadcast %cst_5 : f32 to vector<8x2048xf32>
    %10 = arith.mulf %9, %5 : vector<8x2048xf32>
    %11 = vector.broadcast %8 : vector<1x2048xf32> to vector<8x2048xf32>
    %12 = arith.subf %10, %11 : vector<8x2048xf32>
    %cst_6 = arith.constant 5.000000e-01 : f32
    %13 = vector.broadcast %cst_6 : f32 to vector<8x2048xf32>
    %14 = arith.mulf %12, %13 : vector<8x2048xf32>
    %c0_7 = arith.constant 0 : index
    %c0_8 = arith.constant 0 : index
    %15 = vector.load %arg9[%c0_7, %c0_8] : memref<8x1xf32, #tpu.memory_space<vmem>>, vector<8x1xf32>
    %cst_9 = arith.constant dense<0xFF800000> : vector<8xf32>
    %16 = vector.multi_reduction <maximumf>, %14, %cst_9 [1] : vector<8x2048xf32> to vector<8xf32>
    %17 = vector.shape_cast %16 : vector<8xf32> to vector<8x1xf32>
    %18 = arith.maximumf %15, %17 : vector<8x1xf32>
    %c0_10 = arith.constant 0 : index
    %c0_11 = arith.constant 0 : index
    %19 = vector.load %arg9[%c0_10, %c0_11] : memref<8x1xf32, #tpu.memory_space<vmem>>, vector<8x1xf32>
    %20 = arith.subf %19, %18 : vector<8x1xf32>
    %21 = math.exp %20 : vector<8x1xf32>
    %22 = vector.broadcast %18 : vector<8x1xf32> to vector<8x2048xf32>
    %23 = arith.subf %14, %22 : vector<8x2048xf32>
    %24 = math.exp %23 : vector<8x2048xf32>
    %c0_12 = arith.constant 0 : index
    %c0_13 = arith.constant 0 : index
    %25 = vector.load %arg8[%c0_12, %c0_13] : memref<8x1xf32, #tpu.memory_space<vmem>>, vector<8x1xf32>
    %26 = arith.mulf %21, %25 : vector<8x1xf32>
    %cst_14 = arith.constant dense<0.000000e+00> : vector<8xf32>
    %27 = vector.multi_reduction <add>, %24, %cst_14 [1] : vector<8x2048xf32> to vector<8xf32>
    %28 = vector.shape_cast %27 : vector<8xf32> to vector<8x1xf32>
    %29 = arith.addf %26, %28 : vector<8x1xf32>
    %c0_15 = arith.constant 0 : index
    %c0_16 = arith.constant 0 : index
    %30 = vector.load %arg8[%c0_15, %c0_16] : memref<8x1xf32, #tpu.memory_space<vmem>>, vector<8x1xf32>
    tpu.vector_store %arg8[%c0_15, %c0_16], %29 {strides = array<i32>} : memref<8x1xf32, #tpu.memory_space<vmem>>, vector<8x1xf32>,
    %c0_17 = arith.constant 0 : index
    %c0_18 = arith.constant 0 : index
    %31 = vector.load %arg7[%c0_17, %c0_18] : memref<32x8xf32, #tpu.memory_space<vmem>>, vector<32x8xf32>
    %32 = tpu.transpose %21, [1, 0] : vector<8x1xf32> -> vector<1x8xf32>
    %33 = vector.broadcast %32 : vector<1x8xf32> to vector<32x8xf32>
    %34 = arith.mulf %31, %33 : vector<32x8xf32>
    %cst_19 = arith.constant dense<0.000000e+00> : vector<32x8xf32>
    %35 = tpu.matmul %3, %24, %cst_19 {dimension_numbers = #tpu.dot_dimension_numbers<[1], [1], [0], [0], [0, 0, 1, 0], [], []>} : vector<32x2048xf32>, vector<8x2048xf32>, vector<32x8xf32> -> vector<32x8xf32>
    %36 = arith.addf %34, %35 : vector<32x8xf32>
    %c0_20 = arith.constant 0 : index
    %c0_21 = arith.constant 0 : index
    %37 = vector.load %arg7[%c0_20, %c0_21] : memref<32x8xf32, #tpu.memory_space<vmem>>, vector<32x8xf32>
    tpu.vector_store %arg7[%c0_20, %c0_21], %36 {strides = array<i32>} : memref<32x8xf32, #tpu.memory_space<vmem>>, vector<32x8xf32>,
    %c0_22 = arith.constant 0 : index
    %c0_23 = arith.constant 0 : index
    %38 = vector.load %arg9[%c0_22, %c0_23] : memref<8x1xf32, #tpu.memory_space<vmem>>, vector<8x1xf32>
    tpu.vector_store %arg9[%c0_22, %c0_23], %18 {strides = array<i32>} : memref<8x1xf32, #tpu.memory_space<vmem>>, vector<8x1xf32>,
    %c0_i32_24 = arith.constant 0 : i32
    %39 = arith.cmpi eq, %arg1, %c0_i32_24 : i32
    %40 = arith.extui %39 : i1 to i32
    %c0_i32_25 = arith.constant 0 : i32
    %41 = arith.cmpi ne, %40, %c0_i32_25 : i32
    scf.if %41 {
      %c0_26 = arith.constant 0 : index
      %c0_27 = arith.constant 0 : index
      %42 = vector.load %arg7[%c0_26, %c0_27] : memref<32x8xf32, #tpu.memory_space<vmem>>, vector<32x8xf32>
      %43 = tpu.transpose %42, [1, 0] : vector<32x8xf32> -> vector<8x32xf32>
      %c0_28 = arith.constant 0 : index
      %c0_29 = arith.constant 0 : index
      %c0_30 = arith.constant 0 : index
      %44 = vector.load %arg4[%c0_28, %c0_29, %c0_30] : memref<1x8x32xf32, #tpu.memory_space<vmem>>, vector<1x8x32xf32>
      %45 = vector.shape_cast %44 : vector<1x8x32xf32> to vector<8x32xf32>
      %46 = vector.shape_cast %43 : vector<8x32xf32> to vector<1x8x32xf32>
      tpu.vector_store %arg4[%c0_28, %c0_29, %c0_30], %46 {strides = array<i32>} : memref<1x8x32xf32, #tpu.memory_space<vmem>>, vector<1x8x32xf32>,
      %c0_31 = arith.constant 0 : index
      %c0_32 = arith.constant 0 : index
      %47 = vector.load %arg8[%c0_31, %c0_32] : memref<8x1xf32, #tpu.memory_space<vmem>>, vector<8x1xf32>
      %c0_33 = arith.constant 0 : index
      %c0_34 = arith.constant 0 : index
      %c0_35 = arith.constant 0 : index
      %48 = vector.load %arg5[%c0_33, %c0_34, %c0_35] : memref<1x8x1xf32, #tpu.memory_space<vmem>>, vector<1x8x1xf32>
      %49 = vector.shape_cast %48 : vector<1x8x1xf32> to vector<8x1xf32>
      %50 = vector.shape_cast %47 : vector<8x1xf32> to vector<1x8x1xf32>
      tpu.vector_store %arg5[%c0_33, %c0_34, %c0_35], %50 {strides = array<i32>} : memref<1x8x1xf32, #tpu.memory_space<vmem>>, vector<1x8x1xf32>,
      %c0_36 = arith.constant 0 : index
      %c0_37 = arith.constant 0 : index
      %51 = vector.load %arg9[%c0_36, %c0_37] : memref<8x1xf32, #tpu.memory_space<vmem>>, vector<8x1xf32>
      %c0_38 = arith.constant 0 : index
      %c0_39 = arith.constant 0 : index
      %c0_40 = arith.constant 0 : index
      %52 = vector.load %arg6[%c0_38, %c0_39, %c0_40] : memref<1x8x1xf32, #tpu.memory_space<vmem>>, vector<1x8x1xf32>
      %53 = vector.shape_cast %52 : vector<1x8x1xf32> to vector<8x1xf32>
      %54 = vector.shape_cast %51 : vector<8x1xf32> to vector<1x8x1xf32>
      tpu.vector_store %arg6[%c0_38, %c0_39, %c0_40], %54 {strides = array<i32>} : memref<1x8x1xf32, #tpu.memory_space<vmem>>, vector<1x8x1xf32>,
    } else {
    }
    return
  }
  func.func @transform_0(%arg0: i32, %arg1: i32) -> (i32, i32) {
    %c0_i32 = arith.constant 0 : i32
    %c0_i32_0 = arith.constant 0 : i32
    %c0_i32_1 = arith.constant 0 : i32
    return %c0_i32, %c0_i32_0 : i32, i32
  }
  func.func @transform_1(%arg0: i32, %arg1: i32) -> (i32, i32) {
    %c1_i32 = arith.constant 1 : i32
    %0 = arith.muli %arg0, %c1_i32 : i32
    %1 = arith.addi %0, %arg1 : i32
    %c0_i32 = arith.constant 0 : i32
    %c0_i32_0 = arith.constant 0 : i32
    return %c0_i32, %1 : i32, i32
  }
  func.func @transform_2(%arg0: i32, %arg1: i32) -> (i32, i32, i32) {
    %c0_i32 = arith.constant 0 : i32
    %c0_i32_0 = arith.constant 0 : i32
    %c0_i32_1 = arith.constant 0 : i32
    return %arg0, %c0_i32, %c0_i32_0 : i32, i32, i32
  }
  func.func @transform_3(%arg0: i32, %arg1: i32) -> (i32, i32, i32) {
    %c0_i32 = arith.constant 0 : i32
    %c0_i32_0 = arith.constant 0 : i32
    %c0_i32_1 = arith.constant 0 : i32
    return %arg0, %c0_i32, %c0_i32_0 : i32, i32, i32
  }
  func.func @transform_4(%arg0: i32, %arg1: i32) -> (i32, i32, i32) {
    %c0_i32 = arith.constant 0 : i32
    %c0_i32_0 = arith.constant 0 : i32
    %c0_i32_1 = arith.constant 0 : i32
    return %arg0, %c0_i32, %c0_i32_0 : i32, i32, i32
  }
}

</mosaic_0001>

<llo_original>
// kernel: tpu_custom_call.1
$region0: #{tpu_custom_call.1}
  #allocation0 [shape = 'u32[]', space=smem, size = 0x4, offset = 0x4, fixed_abs, tag = 'smem constant byte address 0x4 - core index']
  #allocation1 [shape = 'u32[144,128]{1,0:T(1,128)}', space=vmem, size = 0x12000, scoped, tag = 'internal scratch']
  #allocation2 [shape = 'f32[32,8]{1,0:T(8,128)}', space=vmem, size = 0x4000, scoped, tag = 'scratch operand']
  #allocation3 [shape = 'f32[8,1]{1,0:T(8,128)}', space=vmem, size = 0x1000, scoped, tag = 'scratch operand']
  #allocation4 [shape = 'f32[8,1]{1,0:T(8,128)}', space=vmem, size = 0x1000, scoped, tag = 'scratch operand']
  %s0 = inlined_call_operand.hbm [shape: f32[8,32], index: 0, kind: input, shape index: {}]
  %s1 = inlined_call_operand.hbm [shape: f32[32,2048], index: 1, kind: input, shape index: {}]
  %s2 = inlined_call_operand.hbm [shape: f32[1,8,32], index: 2, kind: output, shape index: {0}]
  %s3 = inlined_call_operand.vmem [shape: f32[1,8,1], index: 3, kind: output, shape index: {1}]
  %s4 = inlined_call_operand.vmem [shape: f32[1,8,1], index: 4, kind: output, shape index: {2}]
  %5 = xla_tuple %s2, %s3, %s4
  %s6 = sld [smem:[#allocation0]]
  $region50: #{tpu_custom_call.1} parent=0
    _
  %s8 = ssub.s32 1, %s6
  %s9 = scalar_select 0, %s8, %s6
  $region1: #{tpu_custom_call.1} parent=0
    #allocation5 [shape = 'u8[4096]{0}', space=vmem, size = 0x1000, scoped, tag = 'input window, operand 0, single buffered']
    #allocation6 [shape = 's32[1]{0}', space=sflag, size = 0x4, scoped, tag = 'scoped memory for tpu_custom_call.1']
    #allocation7 [shape = 's32[1]{0}', space=sflag, size = 0x4, scoped, tag = 'scoped memory for tpu_custom_call.1']
    #allocation8 [shape = 'u8[262144]{0}', space=vmem, size = 0x40000, scoped, tag = 'input window, operand 1, single buffered']
    #allocation9 [shape = 's32[1]{0}', space=sflag, size = 0x4, scoped, tag = 'scoped memory for tpu_custom_call.1']
    #allocation10 [shape = 'u8[4096]{0}', space=vmem, size = 0x1000, scoped, tag = 'output window, operand 0, single buffered']
    %10 = vsyncpa [#allocation6], 0
    %11 = vsyncpa [#allocation9], 0
    %12 = vsyncpa [#allocation7], 0
    // Predicated region
    $region2: #{tpu_custom_call.1} parent=1 // pred_check
      _
    $region3: #{tpu_custom_call.1} parent=1 // pred_check_branch
      %14 = sbr.rel (0) target = $region5
    $region4: #{tpu_custom_call.1} parent=1 // pred_region
      %s16 = ssub.s32 128, 128
      %17 = vsyncadd [#allocation6], %s16
      %s19 = sshll.u32 [#allocation5], 4
      %s20 = int_to_ptr.vmem [resolvable:$true] %s19
      %22 = dma.hbm_to_vmem [thread:$0]  %s0, 128, %s20, [#allocation6]
    $region5: #{tpu_custom_call.1} parent=1 // pred_fallthru
      _
    // Predicated region
    $region6: #{tpu_custom_call.1} parent=1 // pred_check
      _
    $region7: #{tpu_custom_call.1} parent=1 // pred_check_branch
      %24 = sbr.rel (0) target = $region9
    $region8: #{tpu_custom_call.1} parent=1 // pred_region
      %s25 = sadd.s32 0, 0
      %s26 = smul.u32 16, %s25
      %s28 = ssub.s32 8192, 8192
      %29 = vsyncadd [#allocation9], %s28
      %s30 = smul.addr %s26, 128
      %s31 = scalar_lea.hbm %s1, %s30
      %s32 = sshll.u32 [#allocation8], 4
      %s33 = int_to_ptr.vmem [resolvable:$true] %s32
      %38 = dma.hbm_to_vmem [thread:$0]  %s31, 8192, %s33, [#allocation9], 2048, 2048, 128
    $region9: #{tpu_custom_call.1} parent=1 // pred_fallthru
      _
    // Predicated region
    $region10: #{tpu_custom_call.1} parent=1 // pred_check
      _
    $region11: #{tpu_custom_call.1} parent=1 // pred_check_branch
      %40 = sbr.rel (0) target = $region13
    $region12: #{tpu_custom_call.1} parent=1 // pred_region
      %41 = dma.done [#allocation6], 128
    $region13: #{tpu_custom_call.1} parent=1 // pred_fallthru
      _
    // Predicated region
    $region14: #{tpu_custom_call.1} parent=1 // pred_check
      _
    $region15: #{tpu_custom_call.1} parent=1 // pred_check_branch
      %43 = sbr.rel (0) target = $region17
    $region16: #{tpu_custom_call.1} parent=1 // pred_region
      %44 = dma.done [#allocation9], 8192
    $region17: #{tpu_custom_call.1} parent=1 // pred_fallthru
      _
    %s45 = sadd.s32 0, 0
    %s46 = smul.u32 16, %s45
    %p47 = scmp.eq.s32.totalorder 0, 0
    // Predicated region
    $region18: #{tpu_custom_call.1} parent=1 // pred_check
      %p48 = pneg %p47
    $region19: #{tpu_custom_call.1} parent=1 // pred_check_branch
      %50 = sbr.rel (%p48) target = $region21
    $region20: #{tpu_custom_call.1} parent=1 // pred_region
      %vm51 = vcmask 64512
      %52 = vst.msk [vmem:[#allocation2] sm:$0xff] %vm51, 0.0
      %53 = vst.msk [vmem:[#allocation2 + $0x8] sm:$0xff] %vm51, 0.0
      %54 = vst.msk [vmem:[#allocation2 + $0x10] sm:$0xff] %vm51, 0.0
      %55 = vst.msk [vmem:[#allocation2 + $0x18] sm:$0xff] %vm51, 0.0
      %vm56 = vcmask 7168
      %57 = vst.msk [vmem:[#allocation3] sm:$0xff] %vm56, 0.0
      %58 = vst.msk [vmem:[#allocation4] sm:$0xff] %vm56, -inf
    $region21: #{tpu_custom_call.1} parent=1 // pred_fallthru
      _
    %v59 = vld [vmem:[#allocation8] sm:$0xff]
    %v60 = vld [vmem:[#allocation8 + $0x8] sm:$0xff]
    %v61 = vld [vmem:[#allocation8 + $0x10] sm:$0xff]
    %v62 = vld [vmem:[#allocation8 + $0x18] sm:$0xff]
    %v63 = vld [vmem:[#allocation8 + $0x20] sm:$0xff]
    %v64 = vld [vmem:[#allocation8 + $0x28] sm:$0xff]
    %v65 = vld [vmem:[#allocation8 + $0x30] sm:$0xff]
    %v66 = vld [vmem:[#allocation8 + $0x38] sm:$0xff]
    %v67 = vld [vmem:[#allocation8 + $0x40] sm:$0xff]
    %v68 = vld [vmem:[#allocation8 + $0x48] sm:$0xff]
    %v69 = vld [vmem:[#allocation8 + $0x50] sm:$0xff]
    %v70 = vld [vmem:[#allocation8 + $0x58] sm:$0xff]
    %v71 = vld [vmem:[#allocation8 + $0x60] sm:$0xff]
    %v72 = vld [vmem:[#allocation8 + $0x68] sm:$0xff]
    %v73 = vld [vmem:[#allocation8 + $0x70] sm:$0xff]
    %v74 = vld [vmem:[#allocation8 + $0x78] sm:$0xff]
    %v75 = vld [vmem:[#allocation8 + $0x80] sm:$0xff]
    %v76 = vld [vmem:[#allocation8 + $0x88] sm:$0xff]
    %v77 = vld [vmem:[#allocation8 + $0x90] sm:$0xff]
    %v78 = vld [vmem:[#allocation8 + $0x98] sm:$0xff]
    %v79 = vld [vmem:[#allocation8 + $0xa0] sm:$0xff]
    %v80 = vld [vmem:[#allocation8 + $0xa8] sm:$0xff]
    %v81 = vld [vmem:[#allocation8 + $0xb0] sm:$0xff]
    %v82 = vld [vmem:[#allocation8 + $0xb8] sm:$0xff]
    %v83 = vld [vmem:[#allocation8 + $0xc0] sm:$0xff]
    %v84 = vld [vmem:[#allocation8 + $0xc8] sm:$0xff]
    %v85 = vld [vmem:[#allocation8 + $0xd0] sm:$0xff]
    %v86 = vld [vmem:[#allocation8 + $0xd8] sm:$0xff]
    %v87 = vld [vmem:[#allocation8 + $0xe0] sm:$0xff]
    %v88 = vld [vmem:[#allocation8 + $0xe8] sm:$0xff]
    %v89 = vld [vmem:[#allocation8 + $0xf0] sm:$0xff]
    %v90 = vld [vmem:[#allocation8 + $0xf8] sm:$0xff]
    %v91 = vld [vmem:[#allocation8 + $0x100] sm:$0xff]
    %v92 = vld [vmem:[#allocation8 + $0x108] sm:$0xff]
    %v93 = vld [vmem:[#allocation8 + $0x110] sm:$0xff]
    %v94 = vld [vmem:[#allocation8 + $0x118] sm:$0xff]
    %v95 = vld [vmem:[#allocation8 + $0x120] sm:$0xff]
    %v96 = vld [vmem:[#allocation8 + $0x128] sm:$0xff]
    %v97 = vld [vmem:[#allocation8 + $0x130] sm:$0xff]
    %v98 = vld [vmem:[#allocation8 + $0x138] sm:$0xff]
    %v99 = vld [vmem:[#allocation8 + $0x140] sm:$0xff]
    %v100 = vld [vmem:[#allocation8 + $0x148] sm:$0xff]
    %v101 = vld [vmem:[#allocation8 + $0x150] sm:$0xff]
    %v102 = vld [vmem:[#allocation8 + $0x158] sm:$0xff]
    %v103 = vld [vmem:[#allocation8 + $0x160] sm:$0xff]
    %v104 = vld [vmem:[#allocation8 + $0x168] sm:$0xff]
    %v105 = vld [vmem:[#allocation8 + $0x170] sm:$0xff]
    %v106 = vld [vmem:[#allocation8 + $0x178] sm:$0xff]
    %v107 = vld [vmem:[#allocation8 + $0x180] sm:$0xff]
    %v108 = vld [vmem:[#allocation8 + $0x188] sm:$0xff]
    %v109 = vld [vmem:[#allocation8 + $0x190] sm:$0xff]
    %v110 = vld [vmem:[#allocation8 + $0x198] sm:$0xff]
    %v111 = vld [vmem:[#allocation8 + $0x1a0] sm:$0xff]
    %v112 = vld [vmem:[#allocation8 + $0x1a8] sm:$0xff]
    %v113 = vld [vmem:[#allocation8 + $0x1b0] sm:$0xff]
    %v114 = vld [vmem:[#allocation8 + $0x1b8] sm:$0xff]
    %v115 = vld [vmem:[#allocation8 + $0x1c0] sm:$0xff]
    %v116 = vld [vmem:[#allocation8 + $0x1c8] sm:$0xff]
    %v117 = vld [vmem:[#allocation8 + $0x1d0] sm:$0xff]
    %v118 = vld [vmem:[#allocation8 + $0x1d8] sm:$0xff]
    %v119 = vld [vmem:[#allocation8 + $0x1e0] sm:$0xff]
    %v120 = vld [vmem:[#allocation8 + $0x1e8] sm:$0xff]
    %v121 = vld [vmem:[#allocation8 + $0x1f0] sm:$0xff]
    %v122 = vld [vmem:[#allocation8 + $0x1f8] sm:$0xff]
    %v123 = vld [vmem:[#allocation5] sm:$0xff]
    %vm124 = vcmask 261120
    %v126 = vsel %vm124, %v123, 0
    %128 = vmatprep.subr.mxu0 %v60
    %129 = vmatpush1.msra.mxu0 %v59
    %130 = vmatprep.subr.mxu0 %v76
    %131 = vmatpush1.msra.mxu0 %v75
    %132 = vmatprep.subr.mxu0 %v92
    %133 = vmatpush1.msra.mxu0 %v91
    %134 = vmatprep.subr.mxu0 %v108
    %135 = vmatpush1.msra.mxu0 %v107
    %136 = vmatprep.subr.mxu0 0.0
    %137 = vmatpush1.msra.mxu0 0.0
    %138 = vmatprep.subr.mxu0 0.0
    %139 = vmatpush1.msra.mxu0 0.0
    %140 = vmatprep.subr.mxu0 0.0
    %141 = vmatpush1.msra.mxu0 0.0
    %142 = vmatprep.subr.mxu0 0.0
    %143 = vmatpush1.msra.mxu0 0.0
    %144 = vmatprep.subr.mxu0 0.0
    %145 = vmatpush1.msra.mxu0 0.0
    %146 = vmatprep.subr.mxu0 0.0
    %147 = vmatpush1.msra.mxu0 0.0
    %148 = vmatprep.subr.mxu0 0.0
    %149 = vmatpush1.msra.mxu0 0.0
    %150 = vmatprep.subr.mxu0 0.0
    %151 = vmatpush1.msra.mxu0 0.0
    %152 = vmatprep.subr.mxu0 0.0
    %153 = vmatpush1.msra.mxu0 0.0
    %154 = vmatprep.subr.mxu0 0.0
    %155 = vmatpush1.msra.mxu0 0.0
    %156 = vmatprep.subr.mxu0 0.0
    %157 = vmatpush1.msra.mxu0 0.0
    %158 = vmatprep.subr.mxu0 0.0
    %159 = vmatpush1.msra.mxu0 0.0
    %160 = vmatprep.subr.mxu0 0.0
    %161 = vmatpush1.msra.mxu0 0.0
    %162 = vmatprep.subr.mxu0 0.0
    %163 = vmatpush1.msra.mxu0 0.0
    %164 = vmatprep.subr.mxu0 0.0
    %165 = vmatpush1.msra.mxu0 0.0
    %166 = vmatprep.subr.mxu0 0.0
    %167 = vmatpush1.msra.mxu0 0.0
    %168 = vmatprep.subr.mxu0 0.0
    %169 = vmatpush1.msra.mxu0 0.0
    %170 = vmatprep.subr.mxu0 0.0
    %171 = vmatpush1.msra.mxu0 0.0
    %172 = vmatprep.subr.mxu0 0.0
    %173 = vmatpush1.msra.mxu0 0.0
    %174 = vmatprep.subr.mxu0 0.0
    %175 = vmatpush1.msra.mxu0 0.0
    %176 = vmatprep.subr.mxu0 0.0
    %177 = vmatpush1.msra.mxu0 0.0
    %178 = vmatprep.subr.mxu0 0.0
    %179 = vmatpush1.msra.mxu0 0.0
    %180 = vmatprep.subr.mxu0 0.0
    %181 = vmatpush1.msra.mxu0 0.0
    %182 = vmatprep.subr.mxu0 0.0
    %183 = vmatpush1.msra.mxu0 0.0
    %184 = vmatprep.subr.mxu0 0.0
    %185 = vmatpush1.msra.mxu0 0.0
    %186 = vmatprep.subr.mxu0 0.0
    %187 = vmatpush1.msra.mxu0 0.0
    %188 = vmatprep.subr.mxu0 0.0
    %189 = vmatpush1.msra.mxu0 0.0
    %190 = vmatprep.subr.mxu0 0.0
    %191 = vmatpush1.msra.mxu0 0.0
    %192 = vmatprep.mubr.f32.mxu0 0.0
    %193 = vmatmul.mubr.f32.gmra.mrb[0].mxu0 %v126
    %v194 = vpop.f32.mrb[0].mxu0
    %v195 = vadd.f32 0.0, %v194
    %v196 = vpop.f32.mrb[0].mxu0
    %v197 = vadd.f32 0.0, %v196
    %198 = vdwg.mxu0
    %199 = vmatprep.subr.mxu0 %v62
    %200 = vmatpush1.msra.mxu0 %v61
    %201 = vmatprep.subr.mxu0 %v78
    %202 = vmatpush1.msra.mxu0 %v77
    %203 = vmatprep.subr.mxu0 %v94
    %204 = vmatpush1.msra.mxu0 %v93
    %205 = vmatprep.subr.mxu0 %v110
    %206 = vmatpush1.msra.mxu0 %v109
    %207 = vmatprep.subr.mxu0 0.0
    %208 = vmatpush1.msra.mxu0 0.0
    %209 = vmatprep.subr.mxu0 0.0
    %210 = vmatpush1.msra.mxu0 0.0
    %211 = vmatprep.subr.mxu0 0.0
    %212 = vmatpush1.msra.mxu0 0.0
    %213 = vmatprep.subr.mxu0 0.0
    %214 = vmatpush1.msra.mxu0 0.0
    %215 = vmatprep.subr.mxu0 0.0
    %216 = vmatpush1.msra.mxu0 0.0
    %217 = vmatprep.subr.mxu0 0.0
    %218 = vmatpush1.msra.mxu0 0.0
    %219 = vmatprep.subr.mxu0 0.0
    %220 = vmatpush1.msra.mxu0 0.0
    %221 = vmatprep.subr.mxu0 0.0
    %222 = vmatpush1.msra.mxu0 0.0
    %223 = vmatprep.subr.mxu0 0.0
    %224 = vmatpush1.msra.mxu0 0.0
    %225 = vmatprep.subr.mxu0 0.0
    %226 = vmatpush1.msra.mxu0 0.0
    %227 = vmatprep.subr.mxu0 0.0
    %228 = vmatpush1.msra.mxu0 0.0
    %229 = vmatprep.subr.mxu0 0.0
    %230 = vmatpush1.msra.mxu0 0.0
    %231 = vmatprep.subr.mxu0 0.0
    %232 = vmatpush1.msra.mxu0 0.0
    %233 = vmatprep.subr.mxu0 0.0
    %234 = vmatpush1.msra.mxu0 0.0
    %235 = vmatprep.subr.mxu0 0.0
    %236 = vmatpush1.msra.mxu0 0.0
    %237 = vmatprep.subr.mxu0 0.0
    %238 = vmatpush1.msra.mxu0 0.0
    %239 = vmatprep.subr.mxu0 0.0
    %240 = vmatpush1.msra.mxu0 0.0
    %241 = vmatprep.subr.mxu0 0.0
    %242 = vmatpush1.msra.mxu0 0.0
    %243 = vmatprep.subr.mxu0 0.0
    %244 = vmatpush1.msra.mxu0 0.0
    %245 = vmatprep.subr.mxu0 0.0
    %246 = vmatpush1.msra.mxu0 0.0
    %247 = vmatprep.subr.mxu0 0.0
    %248 = vmatpush1.msra.mxu0 0.0
    %249 = vmatprep.subr.mxu0 0.0
    %250 = vmatpush1.msra.mxu0 0.0
    %251 = vmatprep.subr.mxu0 0.0
    %252 = vmatpush1.msra.mxu0 0.0
    %253 = vmatprep.subr.mxu0 0.0
    %254 = vmatpush1.msra.mxu0 0.0
    %255 = vmatprep.subr.mxu0 0.0
    %256 = vmatpush1.msra.mxu0 0.0
    %257 = vmatprep.subr.mxu0 0.0
    %258 = vmatpush1.msra.mxu0 0.0
    %259 = vmatprep.subr.mxu0 0.0
    %260 = vmatpush1.msra.mxu0 0.0
    %261 = vmatprep.subr.mxu0 0.0
    %262 = vmatpush1.msra.mxu0 0.0
    %263 = vmatprep.mubr.f32.mxu0 0.0
    %264 = vmatmul.mubr.f32.gmra.mrb[0].mxu0 %v126
    %v265 = vpop.f32.mrb[0].mxu0
    %v266 = vadd.f32 0.0, %v265
    %v267 = vpop.f32.mrb[0].mxu0
    %v268 = vadd.f32 0.0, %v267
    %269 = vdwg.mxu0
    %270 = vmatprep.subr.mxu0 %v64
    %271 = vmatpush1.msra.mxu0 %v63
    %272 = vmatprep.subr.mxu0 %v80
    %273 = vmatpush1.msra.mxu0 %v79
    %274 = vmatprep.subr.mxu0 %v96
    %275 = vmatpush1.msra.mxu0 %v95
    %276 = vmatprep.subr.mxu0 %v112
    %277 = vmatpush1.msra.mxu0 %v111
    %278 = vmatprep.subr.mxu0 0.0
    %279 = vmatpush1.msra.mxu0 0.0
    %280 = vmatprep.subr.mxu0 0.0
    %281 = vmatpush1.msra.mxu0 0.0
    %282 = vmatprep.subr.mxu0 0.0
    %283 = vmatpush1.msra.mxu0 0.0
    %284 = vmatprep.subr.mxu0 0.0
    %285 = vmatpush1.msra.mxu0 0.0
    %286 = vmatprep.subr.mxu0 0.0
    %287 = vmatpush1.msra.mxu0 0.0
    %288 = vmatprep.subr.mxu0 0.0
    %289 = vmatpush1.msra.mxu0 0.0
    %290 = vmatprep.subr.mxu0 0.0
    %291 = vmatpush1.msra.mxu0 0.0
    %292 = vmatprep.subr.mxu0 0.0
    %293 = vmatpush1.msra.mxu0 0.0
    %294 = vmatprep.subr.mxu0 0.0
    %295 = vmatpush1.msra.mxu0 0.0
    %296 = vmatprep.subr.mxu0 0.0
    %297 = vmatpush1.msra.mxu0 0.0
    %298 = vmatprep.subr.mxu0 0.0
    %299 = vmatpush1.msra.mxu0 0.0
    %300 = vmatprep.subr.mxu0 0.0
    %301 = vmatpush1.msra.mxu0 0.0
    %302 = vmatprep.subr.mxu0 0.0
    %303 = vmatpush1.msra.mxu0 0.0
    %304 = vmatprep.subr.mxu0 0.0
    %305 = vmatpush1.msra.mxu0 0.0
    %306 = vmatprep.subr.mxu0 0.0
    %307 = vmatpush1.msra.mxu0 0.0
    %308 = vmatprep.subr.mxu0 0.0
    %309 = vmatpush1.msra.mxu0 0.0
    %310 = vmatprep.subr.mxu0 0.0
    %311 = vmatpush1.msra.mxu0 0.0
    %312 = vmatprep.subr.mxu0 0.0
    %313 = vmatpush1.msra.mxu0 0.0
    %314 = vmatprep.subr.mxu0 0.0
    %315 = vmatpush1.msra.mxu0 0.0
    %316 = vmatprep.subr.mxu0 0.0
    %317 = vmatpush1.msra.mxu0 0.0
    %318 = vmatprep.subr.mxu0 0.0
    %319 = vmatpush1.msra.mxu0 0.0
    %320 = vmatprep.subr.mxu0 0.0
    %321 = vmatpush1.msra.mxu0 0.0
    %322 = vmatprep.subr.mxu0 0.0
    %323 = vmatpush1.msra.mxu0 0.0
    %324 = vmatprep.subr.mxu0 0.0
    %325 = vmatpush1.msra.mxu0 0.0
    %326 = vmatprep.subr.mxu0 0.0
    %327 = vmatpush1.msra.mxu0 0.0
    %328 = vmatprep.subr.mxu0 0.0
    %329 = vmatpush1.msra.mxu0 0.0
    %330 = vmatprep.subr.mxu0 0.0
    %331 = vmatpush1.msra.mxu0 0.0
    %332 = vmatprep.subr.mxu0 0.0
    %333 = vmatpush1.msra.mxu0 0.0
    %334 = vmatprep.mubr.f32.mxu0 0.0
    %335 = vmatmul.mubr.f32.gmra.mrb[0].mxu0 %v126
    %v336 = vpop.f32.mrb[0].mxu0
    %v337 = vadd.f32 0.0, %v336
    %v338 = vpop.f32.mrb[0].mxu0
    %v339 = vadd.f32 0.0, %v338
    %340 = vdwg.mxu0
    %341 = vmatprep.subr.mxu0 %v66
    %342 = vmatpush1.msra.mxu0 %v65
    %343 = vmatprep.subr.mxu0 %v82
    %344 = vmatpush1.msra.mxu0 %v81
    %345 = vmatprep.subr.mxu0 %v98
    %346 = vmatpush1.msra.mxu0 %v97
    %347 = vmatprep.subr.mxu0 %v114
    %348 = vmatpush1.msra.mxu0 %v113
    %349 = vmatprep.subr.mxu0 0.0
    %350 = vmatpush1.msra.mxu0 0.0
    %351 = vmatprep.subr.mxu0 0.0
    %352 = vmatpush1.msra.mxu0 0.0
    %353 = vmatprep.subr.mxu0 0.0
    %354 = vmatpush1.msra.mxu0 0.0
    %355 = vmatprep.subr.mxu0 0.0
    %356 = vmatpush1.msra.mxu0 0.0
    %357 = vmatprep.subr.mxu0 0.0
    %358 = vmatpush1.msra.mxu0 0.0
    %359 = vmatprep.subr.mxu0 0.0
    %360 = vmatpush1.msra.mxu0 0.0
    %361 = vmatprep.subr.mxu0 0.0
    %362 = vmatpush1.msra.mxu0 0.0
    %363 = vmatprep.subr.mxu0 0.0
    %364 = vmatpush1.msra.mxu0 0.0
    %365 = vmatprep.subr.mxu0 0.0
    %366 = vmatpush1.msra.mxu0 0.0
    %367 = vmatprep.subr.mxu0 0.0
    %368 = vmatpush1.msra.mxu0 0.0
    %369 = vmatprep.subr.mxu0 0.0
    %370 = vmatpush1.msra.mxu0 0.0
    %371 = vmatprep.subr.mxu0 0.0
    %372 = vmatpush1.msra.mxu0 0.0
    %373 = vmatprep.subr.mxu0 0.0
    %374 = vmatpush1.msra.mxu0 0.0
    %375 = vmatprep.subr.mxu0 0.0
    %376 = vmatpush1.msra.mxu0 0.0
    %377 = vmatprep.subr.mxu0 0.0
    %378 = vmatpush1.msra.mxu0 0.0
    %379 = vmatprep.subr.mxu0 0.0
    %380 = vmatpush1.msra.mxu0 0.0
    %381 = vmatprep.subr.mxu0 0.0
    %382 = vmatpush1.msra.mxu0 0.0
    %383 = vmatprep.subr.mxu0 0.0
    %384 = vmatpush1.msra.mxu0 0.0
    %385 = vmatprep.subr.mxu0 0.0
    %386 = vmatpush1.msra.mxu0 0.0
    %387 = vmatprep.subr.mxu0 0.0
    %388 = vmatpush1.msra.mxu0 0.0
    %389 = vmatprep.subr.mxu0 0.0
    %390 = vmatpush1.msra.mxu0 0.0
    %391 = vmatprep.subr.mxu0 0.0
    %392 = vmatpush1.msra.mxu0 0.0
    %393 = vmatprep.subr.mxu0 0.0
    %394 = vmatpush1.msra.mxu0 0.0
    %395 = vmatprep.subr.mxu0 0.0
    %396 = vmatpush1.msra.mxu0 0.0
    %397 = vmatprep.subr.mxu0 0.0
    %398 = vmatpush1.msra.mxu0 0.0
    %399 = vmatprep.subr.mxu0 0.0
    %400 = vmatpush1.msra.mxu0 0.0
    %401 = vmatprep.subr.mxu0 0.0
    %402 = vmatpush1.msra.mxu0 0.0
    %403 = vmatprep.subr.mxu0 0.0
    %404 = vmatpush1.msra.mxu0 0.0
    %405 = vmatprep.mubr.f32.mxu0 0.0
    %406 = vmatmul.mubr.f32.gmra.mrb[0].mxu0 %v126
    %v407 = vpop.f32.mrb[0].mxu0
    %v408 = vadd.f32 0.0, %v407
    %v409 = vpop.f32.mrb[0].mxu0
    %v410 = vadd.f32 0.0, %v409
    %411 = vdwg.mxu0
    %412 = vmatprep.subr.mxu0 %v68
    %413 = vmatpush1.msra.mxu0 %v67
    %414 = vmatprep.subr.mxu0 %v84
    %415 = vmatpush1.msra.mxu0 %v83
    %416 = vmatprep.subr.mxu0 %v100
    %417 = vmatpush1.msra.mxu0 %v99
    %418 = vmatprep.subr.mxu0 %v116
    %419 = vmatpush1.msra.mxu0 %v115
    %420 = vmatprep.subr.mxu0 0.0
    %421 = vmatpush1.msra.mxu0 0.0
    %422 = vmatprep.subr.mxu0 0.0
    %423 = vmatpush1.msra.mxu0 0.0
    %424 = vmatprep.subr.mxu0 0.0
    %425 = vmatpush1.msra.mxu0 0.0
    %426 = vmatprep.subr.mxu0 0.0
    %427 = vmatpush1.msra.mxu0 0.0
    %428 = vmatprep.subr.mxu0 0.0
    %429 = vmatpush1.msra.mxu0 0.0
    %430 = vmatprep.subr.mxu0 0.0
    %431 = vmatpush1.msra.mxu0 0.0
    %432 = vmatprep.subr.mxu0 0.0
    %433 = vmatpush1.msra.mxu0 0.0
    %434 = vmatprep.subr.mxu0 0.0
    %435 = vmatpush1.msra.mxu0 0.0
    %436 = vmatprep.subr.mxu0 0.0
    %437 = vmatpush1.msra.mxu0 0.0
    %438 = vmatprep.subr.mxu0 0.0
    %439 = vmatpush1.msra.mxu0 0.0
    %440 = vmatprep.subr.mxu0 0.0
    %441 = vmatpush1.msra.mxu0 0.0
    %442 = vmatprep.subr.mxu0 0.0
    %443 = vmatpush1.msra.mxu0 0.0
    %444 = vmatprep.subr.mxu0 0.0
    %445 = vmatpush1.msra.mxu0 0.0
    %446 = vmatprep.subr.mxu0 0.0
    %447 = vmatpush1.msra.mxu0 0.0
    %448 = vmatprep.subr.mxu0 0.0
    %449 = vmatpush1.msra.mxu0 0.0
    %450 = vmatprep.subr.mxu0 0.0
    %451 = vmatpush1.msra.mxu0 0.0
    %452 = vmatprep.subr.mxu0 0.0
    %453 = vmatpush1.msra.mxu0 0.0
    %454 = vmatprep.subr.mxu0 0.0
    %455 = vmatpush1.msra.mxu0 0.0
    %456 = vmatprep.subr.mxu0 0.0
    %457 = vmatpush1.msra.mxu0 0.0
    %458 = vmatprep.subr.mxu0 0.0
    %459 = vmatpush1.msra.mxu0 0.0
    %460 = vmatprep.subr.mxu0 0.0
    %461 = vmatpush1.msra.mxu0 0.0
    %462 = vmatprep.subr.mxu0 0.0
    %463 = vmatpush1.msra.mxu0 0.0
    %464 = vmatprep.subr.mxu0 0.0
    %465 = vmatpush1.msra.mxu0 0.0
    %466 = vmatprep.subr.mxu0 0.0
    %467 = vmatpush1.msra.mxu0 0.0
    %468 = vmatprep.subr.mxu0 0.0
    %469 = vmatpush1.msra.mxu0 0.0
    %470 = vmatprep.subr.mxu0 0.0
    %471 = vmatpush1.msra.mxu0 0.0
    %472 = vmatprep.subr.mxu0 0.0
    %473 = vmatpush1.msra.mxu0 0.0
    %474 = vmatprep.subr.mxu0 0.0
    %475 = vmatpush1.msra.mxu0 0.0
    %476 = vmatprep.mubr.f32.mxu0 0.0
    %477 = vmatmul.mubr.f32.gmra.mrb[0].mxu0 %v126
    %v478 = vpop.f32.mrb[0].mxu0
    %v479 = vadd.f32 0.0, %v478
    %v480 = vpop.f32.mrb[0].mxu0
    %v481 = vadd.f32 0.0, %v480
    %482 = vdwg.mxu0
    %483 = vmatprep.subr.mxu0 %v70
    %484 = vmatpush1.msra.mxu0 %v69
    %485 = vmatprep.subr.mxu0 %v86
    %486 = vmatpush1.msra.mxu0 %v85
    %487 = vmatprep.subr.mxu0 %v102
    %488 = vmatpush1.msra.mxu0 %v101
    %489 = vmatprep.subr.mxu0 %v118
    %490 = vmatpush1.msra.mxu0 %v117
    %491 = vmatprep.subr.mxu0 0.0
    %492 = vmatpush1.msra.mxu0 0.0
    %493 = vmatprep.subr.mxu0 0.0
    %494 = vmatpush1.msra.mxu0 0.0
    %495 = vmatprep.subr.mxu0 0.0
    %496 = vmatpush1.msra.mxu0 0.0
    %497 = vmatprep.subr.mxu0 0.0
    %498 = vmatpush1.msra.mxu0 0.0
    %499 = vmatprep.subr.mxu0 0.0
    %500 = vmatpush1.msra.mxu0 0.0
    %501 = vmatprep.subr.mxu0 0.0
    %502 = vmatpush1.msra.mxu0 0.0
    %503 = vmatprep.subr.mxu0 0.0
    %504 = vmatpush1.msra.mxu0 0.0
    %505 = vmatprep.subr.mxu0 0.0
    %506 = vmatpush1.msra.mxu0 0.0
    %507 = vmatprep.subr.mxu0 0.0
    %508 = vmatpush1.msra.mxu0 0.0
    %509 = vmatprep.subr.mxu0 0.0
    %510 = vmatpush1.msra.mxu0 0.0
    %511 = vmatprep.subr.mxu0 0.0
    %512 = vmatpush1.msra.mxu0 0.0
    %513 = vmatprep.subr.mxu0 0.0
    %514 = vmatpush1.msra.mxu0 0.0
    %515 = vmatprep.subr.mxu0 0.0
    %516 = vmatpush1.msra.mxu0 0.0
    %517 = vmatprep.subr.mxu0 0.0
    %518 = vmatpush1.msra.mxu0 0.0
    %519 = vmatprep.subr.mxu0 0.0
    %520 = vmatpush1.msra.mxu0 0.0
    %521 = vmatprep.subr.mxu0 0.0
    %522 = vmatpush1.msra.mxu0 0.0
    %523 = vmatprep.subr.mxu0 0.0
    %524 = vmatpush1.msra.mxu0 0.0
    %525 = vmatprep.subr.mxu0 0.0
    %526 = vmatpush1.msra.mxu0 0.0
    %527 = vmatprep.subr.mxu0 0.0
    %528 = vmatpush1.msra.mxu0 0.0
    %529 = vmatprep.subr.mxu0 0.0
    %530 = vmatpush1.msra.mxu0 0.0
    %531 = vmatprep.subr.mxu0 0.0
    %532 = vmatpush1.msra.mxu0 0.0
    %533 = vmatprep.subr.mxu0 0.0
    %534 = vmatpush1.msra.mxu0 0.0
    %535 = vmatprep.subr.mxu0 0.0
    %536 = vmatpush1.msra.mxu0 0.0
    %537 = vmatprep.subr.mxu0 0.0
    %538 = vmatpush1.msra.mxu0 0.0
    %539 = vmatprep.subr.mxu0 0.0
    %540 = vmatpush1.msra.mxu0 0.0
    %541 = vmatprep.subr.mxu0 0.0
    %542 = vmatpush1.msra.mxu0 0.0
    %543 = vmatprep.subr.mxu0 0.0
    %544 = vmatpush1.msra.mxu0 0.0
    %545 = vmatprep.subr.mxu0 0.0
    %546 = vmatpush1.msra.mxu0 0.0
    %547 = vmatprep.mubr.f32.mxu0 0.0
    %548 = vmatmul.mubr.f32.gmra.mrb[0].mxu0 %v126
    %v549 = vpop.f32.mrb[0].mxu0
    %v550 = vadd.f32 0.0, %v549
    %v551 = vpop.f32.mrb[0].mxu0
    %v552 = vadd.f32 0.0, %v551
    %553 = vdwg.mxu0
    %554 = vmatprep.subr.mxu0 %v72
    %555 = vmatpush1.msra.mxu0 %v71
    %556 = vmatprep.subr.mxu0 %v88
    %557 = vmatpush1.msra.mxu0 %v87
    %558 = vmatprep.subr.mxu0 %v104
    %559 = vmatpush1.msra.mxu0 %v103
    %560 = vmatprep.subr.mxu0 %v120
    %561 = vmatpush1.msra.mxu0 %v119
    %562 = vmatprep.subr.mxu0 0.0
    %563 = vmatpush1.msra.mxu0 0.0
    %564 = vmatprep.subr.mxu0 0.0
    %565 = vmatpush1.msra.mxu0 0.0
    %566 = vmatprep.subr.mxu0 0.0
    %567 = vmatpush1.msra.mxu0 0.0
    %568 = vmatprep.subr.mxu0 0.0
    %569 = vmatpush1.msra.mxu0 0.0
    %570 = vmatprep.subr.mxu0 0.0
    %571 = vmatpush1.msra.mxu0 0.0
    %572 = vmatprep.subr.mxu0 0.0
    %573 = vmatpush1.msra.mxu0 0.0
    %574 = vmatprep.subr.mxu0 0.0
    %575 = vmatpush1.msra.mxu0 0.0
    %576 = vmatprep.subr.mxu0 0.0
    %577 = vmatpush1.msra.mxu0 0.0
    %578 = vmatprep.subr.mxu0 0.0
    %579 = vmatpush1.msra.mxu0 0.0
    %580 = vmatprep.subr.mxu0 0.0
    %581 = vmatpush1.msra.mxu0 0.0
    %582 = vmatprep.subr.mxu0 0.0
    %583 = vmatpush1.msra.mxu0 0.0
    %584 = vmatprep.subr.mxu0 0.0
    %585 = vmatpush1.msra.mxu0 0.0
    %586 = vmatprep.subr.mxu0 0.0
    %587 = vmatpush1.msra.mxu0 0.0
    %588 = vmatprep.subr.mxu0 0.0
    %589 = vmatpush1.msra.mxu0 0.0
    %590 = vmatprep.subr.mxu0 0.0
    %591 = vmatpush1.msra.mxu0 0.0
    %592 = vmatprep.subr.mxu0 0.0
    %593 = vmatpush1.msra.mxu0 0.0
    %594 = vmatprep.subr.mxu0 0.0
    %595 = vmatpush1.msra.mxu0 0.0
    %596 = vmatprep.subr.mxu0 0.0
    %597 = vmatpush1.msra.mxu0 0.0
    %598 = vmatprep.subr.mxu0 0.0
    %599 = vmatpush1.msra.mxu0 0.0
    %600 = vmatprep.subr.mxu0 0.0
    %601 = vmatpush1.msra.mxu0 0.0
    %602 = vmatprep.subr.mxu0 0.0
    %603 = vmatpush1.msra.mxu0 0.0
    %604 = vmatprep.subr.mxu0 0.0
    %605 = vmatpush1.msra.mxu0 0.0
    %606 = vmatprep.subr.mxu0 0.0
    %607 = vmatpush1.msra.mxu0 0.0
    %608 = vmatprep.subr.mxu0 0.0
    %609 = vmatpush1.msra.mxu0 0.0
    %610 = vmatprep.subr.mxu0 0.0
    %611 = vmatpush1.msra.mxu0 0.0
    %612 = vmatprep.subr.mxu0 0.0
    %613 = vmatpush1.msra.mxu0 0.0
    %614 = vmatprep.subr.mxu0 0.0
    %615 = vmatpush1.msra.mxu0 0.0
    %616 = vmatprep.subr.mxu0 0.0
    %617 = vmatpush1.msra.mxu0 0.0
    %618 = vmatprep.mubr.f32.mxu0 0.0
    %619 = vmatmul.mubr.f32.gmra.mrb[0].mxu0 %v126
    %v620 = vpop.f32.mrb[0].mxu0
    %v621 = vadd.f32 0.0, %v620
    %v622 = vpop.f32.mrb[0].mxu0
    %v623 = vadd.f32 0.0, %v622
    %624 = vdwg.mxu0
    %625 = vmatprep.subr.mxu0 %v74
    %626 = vmatpush1.msra.mxu0 %v73
    %627 = vmatprep.subr.mxu0 %v90
    %628 = vmatpush1.msra.mxu0 %v89
    %629 = vmatprep.subr.mxu0 %v106
    %630 = vmatpush1.msra.mxu0 %v105
    %631 = vmatprep.subr.mxu0 %v122
    %632 = vmatpush1.msra.mxu0 %v121
    %633 = vmatprep.subr.mxu0 0.0
    %634 = vmatpush1.msra.mxu0 0.0
    %635 = vmatprep.subr.mxu0 0.0
    %636 = vmatpush1.msra.mxu0 0.0
    %637 = vmatprep.subr.mxu0 0.0
    %638 = vmatpush1.msra.mxu0 0.0
    %639 = vmatprep.subr.mxu0 0.0
    %640 = vmatpush1.msra.mxu0 0.0
    %641 = vmatprep.subr.mxu0 0.0
    %642 = vmatpush1.msra.mxu0 0.0
    %643 = vmatprep.subr.mxu0 0.0
    %644 = vmatpush1.msra.mxu0 0.0
    %645 = vmatprep.subr.mxu0 0.0
    %646 = vmatpush1.msra.mxu0 0.0
    %647 = vmatprep.subr.mxu0 0.0
    %648 = vmatpush1.msra.mxu0 0.0
    %649 = vmatprep.subr.mxu0 0.0
    %650 = vmatpush1.msra.mxu0 0.0
    %651 = vmatprep.subr.mxu0 0.0
    %652 = vmatpush1.msra.mxu0 0.0
    %653 = vmatprep.subr.mxu0 0.0
    %654 = vmatpush1.msra.mxu0 0.0
    %655 = vmatprep.subr.mxu0 0.0
    %656 = vmatpush1.msra.mxu0 0.0
    %657 = vmatprep.subr.mxu0 0.0
    %658 = vmatpush1.msra.mxu0 0.0
    %659 = vmatprep.subr.mxu0 0.0
    %660 = vmatpush1.msra.mxu0 0.0
    %661 = vmatprep.subr.mxu0 0.0
    %662 = vmatpush1.msra.mxu0 0.0
    %663 = vmatprep.subr.mxu0 0.0
    %664 = vmatpush1.msra.mxu0 0.0
    %665 = vmatprep.subr.mxu0 0.0
    %666 = vmatpush1.msra.mxu0 0.0
    %667 = vmatprep.subr.mxu0 0.0
    %668 = vmatpush1.msra.mxu0 0.0
    %669 = vmatprep.subr.mxu0 0.0
    %670 = vmatpush1.msra.mxu0 0.0
    %671 = vmatprep.subr.mxu0 0.0
    %672 = vmatpush1.msra.mxu0 0.0
    %673 = vmatprep.subr.mxu0 0.0
    %674 = vmatpush1.msra.mxu0 0.0
    %675 = vmatprep.subr.mxu0 0.0
    %676 = vmatpush1.msra.mxu0 0.0
    %677 = vmatprep.subr.mxu0 0.0
    %678 = vmatpush1.msra.mxu0 0.0
    %679 = vmatprep.subr.mxu0 0.0
    %680 = vmatpush1.msra.mxu0 0.0
    %681 = vmatprep.subr.mxu0 0.0
    %682 = vmatpush1.msra.mxu0 0.0
    %683 = vmatprep.subr.mxu0 0.0
    %684 = vmatpush1.msra.mxu0 0.0
    %685 = vmatprep.subr.mxu0 0.0
    %686 = vmatpush1.msra.mxu0 0.0
    %687 = vmatprep.subr.mxu0 0.0
    %688 = vmatpush1.msra.mxu0 0.0
    %689 = vmatprep.mubr.f32.mxu0 0.0
    %690 = vmatmul.mubr.f32.gmra.mrb[0].mxu0 %v126
    %v691 = vpop.f32.mrb[0].mxu0
    %v692 = vadd.f32 0.0, %v691
    %v693 = vpop.f32.mrb[0].mxu0
    %v694 = vadd.f32 0.0, %v693
    %695 = vdwg.mxu0
    %v696 = vmul.f32 %v59, %v59
    %v697 = vmul.f32 %v60, %v60
    %v698 = vmul.f32 %v61, %v61
    %v699 = vmul.f32 %v62, %v62
    %v700 = vmul.f32 %v63, %v63
    %v701 = vmul.f32 %v64, %v64
    %v702 = vmul.f32 %v65, %v65
    %v703 = vmul.f32 %v66, %v66
    %v704 = vmul.f32 %v67, %v67
    %v705 = vmul.f32 %v68, %v68
    %v706 = vmul.f32 %v69, %v69
    %v707 = vmul.f32 %v70, %v70
    %v708 = vmul.f32 %v71, %v71
    %v709 = vmul.f32 %v72, %v72
    %v710 = vmul.f32 %v73, %v73
    %v711 = vmul.f32 %v74, %v74
    %v712 = vmul.f32 %v75, %v75
    %v713 = vmul.f32 %v76, %v76
    %v714 = vmul.f32 %v77, %v77
    %v715 = vmul.f32 %v78, %v78
    %v716 = vmul.f32 %v79, %v79
    %v717 = vmul.f32 %v80, %v80
    %v718 = vmul.f32 %v81, %v81
    %v719 = vmul.f32 %v82, %v82
    %v720 = vmul.f32 %v83, %v83
    %v721 = vmul.f32 %v84, %v84
    %v722 = vmul.f32 %v85, %v85
    %v723 = vmul.f32 %v86, %v86
    %v724 = vmul.f32 %v87, %v87
    %v725 = vmul.f32 %v88, %v88
    %v726 = vmul.f32 %v89, %v89
    %v727 = vmul.f32 %v90, %v90
    %v728 = vmul.f32 %v91, %v91
    %v729 = vmul.f32 %v92, %v92
    %v730 = vmul.f32 %v93, %v93
    %v731 = vmul.f32 %v94, %v94
    %v732 = vmul.f32 %v95, %v95
    %v733 = vmul.f32 %v96, %v96
    %v734 = vmul.f32 %v97, %v97
    %v735 = vmul.f32 %v98, %v98
    %v736 = vmul.f32 %v99, %v99
    %v737 = vmul.f32 %v100, %v100
    %v738 = vmul.f32 %v101, %v101
    %v739 = vmul.f32 %v102, %v102
    %v740 = vmul.f32 %v103, %v103
    %v741 = vmul.f32 %v104, %v104
    %v742 = vmul.f32 %v105, %v105
    %v743 = vmul.f32 %v106, %v106
    %v744 = vmul.f32 %v107, %v107
    %v745 = vmul.f32 %v108, %v108
    %v746 = vmul.f32 %v109, %v109
    %v747 = vmul.f32 %v110, %v110
    %v748 = vmul.f32 %v111, %v111
    %v749 = vmul.f32 %v112, %v112
    %v750 = vmul.f32 %v113, %v113
    %v751 = vmul.f32 %v114, %v114
    %v752 = vmul.f32 %v115, %v115
    %v753 = vmul.f32 %v116, %v116
    %v754 = vmul.f32 %v117, %v117
    %v755 = vmul.f32 %v118, %v118
    %v756 = vmul.f32 %v119, %v119
    %v757 = vmul.f32 %v120, %v120
    %v758 = vmul.f32 %v121, %v121
    %v759 = vmul.f32 %v122, %v122
    %v760 = vadd.f32 %v696, %v712
    %v761 = vadd.f32 %v760, %v728
    %v762 = vadd.f32 %v761, %v744
    %v763 = vrot.slane %v762, 4
    %v764 = vadd.f32 %v762, %v763
    %v765 = vrot.slane %v764, 2
    %v766 = vadd.f32 %v764, %v765
    %v767 = vrot.slane %v766, 1
    %v768 = vadd.f32 %v766, %v767
    %v769 = vadd.f32 %v697, %v713
    %v770 = vadd.f32 %v769, %v729
    %v771 = vadd.f32 %v770, %v745
    %v772 = vrot.slane %v771, 4
    %v773 = vadd.f32 %v771, %v772
    %v774 = vrot.slane %v773, 2
    %v775 = vadd.f32 %v773, %v774
    %v776 = vrot.slane %v775, 1
    %v777 = vadd.f32 %v775, %v776
    %v778 = vadd.f32 %v698, %v714
    %v779 = vadd.f32 %v778, %v730
    %v780 = vadd.f32 %v779, %v746
    %v781 = vrot.slane %v780, 4
    %v782 = vadd.f32 %v780, %v781
    %v783 = vrot.slane %v782, 2
    %v784 = vadd.f32 %v782, %v783
    %v785 = vrot.slane %v784, 1
    %v786 = vadd.f32 %v784, %v785
    %v787 = vadd.f32 %v699, %v715
    %v788 = vadd.f32 %v787, %v731
    %v789 = vadd.f32 %v788, %v747
    %v790 = vrot.slane %v789, 4
    %v791 = vadd.f32 %v789, %v790
    %v792 = vrot.slane %v791, 2
    %v793 = vadd.f32 %v791, %v792
    %v794 = vrot.slane %v793, 1
    %v795 = vadd.f32 %v793, %v794
    %v796 = vadd.f32 %v700, %v716
    %v797 = vadd.f32 %v796, %v732
    %v798 = vadd.f32 %v797, %v748
    %v799 = vrot.slane %v798, 4
    %v800 = vadd.f32 %v798, %v799
    %v801 = vrot.slane %v800, 2
    %v802 = vadd.f32 %v800, %v801
    %v803 = vrot.slane %v802, 1
    %v804 = vadd.f32 %v802, %v803
    %v805 = vadd.f32 %v701, %v717
    %v806 = vadd.f32 %v805, %v733
    %v807 = vadd.f32 %v806, %v749
    %v808 = vrot.slane %v807, 4
    %v809 = vadd.f32 %v807, %v808
    %v810 = vrot.slane %v809, 2
    %v811 = vadd.f32 %v809, %v810
    %v812 = vrot.slane %v811, 1
    %v813 = vadd.f32 %v811, %v812
    %v814 = vadd.f32 %v702, %v718
    %v815 = vadd.f32 %v814, %v734
    %v816 = vadd.f32 %v815, %v750
    %v817 = vrot.slane %v816, 4
    %v818 = vadd.f32 %v816, %v817
    %v819 = vrot.slane %v818, 2
    %v820 = vadd.f32 %v818, %v819
    %v821 = vrot.slane %v820, 1
    %v822 = vadd.f32 %v820, %v821
    %v823 = vadd.f32 %v703, %v719
    %v824 = vadd.f32 %v823, %v735
    %v825 = vadd.f32 %v824, %v751
    %v826 = vrot.slane %v825, 4
    %v827 = vadd.f32 %v825, %v826
    %v828 = vrot.slane %v827, 2
    %v829 = vadd.f32 %v827, %v828
    %v830 = vrot.slane %v829, 1
    %v831 = vadd.f32 %v829, %v830
    %v832 = vadd.f32 %v704, %v720
    %v833 = vadd.f32 %v832, %v736
    %v834 = vadd.f32 %v833, %v752
    %v835 = vrot.slane %v834, 4
    %v836 = vadd.f32 %v834, %v835
    %v837 = vrot.slane %v836, 2
    %v838 = vadd.f32 %v836, %v837
    %v839 = vrot.slane %v838, 1
    %v840 = vadd.f32 %v838, %v839
    %v841 = vadd.f32 %v705, %v721
    %v842 = vadd.f32 %v841, %v737
    %v843 = vadd.f32 %v842, %v753
    %v844 = vrot.slane %v843, 4
    %v845 = vadd.f32 %v843, %v844
    %v846 = vrot.slane %v845, 2
    %v847 = vadd.f32 %v845, %v846
    %v848 = vrot.slane %v847, 1
    %v849 = vadd.f32 %v847, %v848
    %v850 = vadd.f32 %v706, %v722
    %v851 = vadd.f32 %v850, %v738
    %v852 = vadd.f32 %v851, %v754
    %v853 = vrot.slane %v852, 4
    %v854 = vadd.f32 %v852, %v853
    %v855 = vrot.slane %v854, 2
    %v856 = vadd.f32 %v854, %v855
    %v857 = vrot.slane %v856, 1
    %v858 = vadd.f32 %v856, %v857
    %v859 = vadd.f32 %v707, %v723
    %v860 = vadd.f32 %v859, %v739
    %v861 = vadd.f32 %v860, %v755
    %v862 = vrot.slane %v861, 4
    %v863 = vadd.f32 %v861, %v862
    %v864 = vrot.slane %v863, 2
    %v865 = vadd.f32 %v863, %v864
    %v866 = vrot.slane %v865, 1
    %v867 = vadd.f32 %v865, %v866
    %v868 = vadd.f32 %v708, %v724
    %v869 = vadd.f32 %v868, %v740
    %v870 = vadd.f32 %v869, %v756
    %v871 = vrot.slane %v870, 4
    %v872 = vadd.f32 %v870, %v871
    %v873 = vrot.slane %v872, 2
    %v874 = vadd.f32 %v872, %v873
    %v875 = vrot.slane %v874, 1
    %v876 = vadd.f32 %v874, %v875
    %v877 = vadd.f32 %v709, %v725
    %v878 = vadd.f32 %v877, %v741
    %v879 = vadd.f32 %v878, %v757
    %v880 = vrot.slane %v879, 4
    %v881 = vadd.f32 %v879, %v880
    %v882 = vrot.slane %v881, 2
    %v883 = vadd.f32 %v881, %v882
    %v884 = vrot.slane %v883, 1
    %v885 = vadd.f32 %v883, %v884
    %v886 = vadd.f32 %v710, %v726
    %v887 = vadd.f32 %v886, %v742
    %v888 = vadd.f32 %v887, %v758
    %v889 = vrot.slane %v888, 4
    %v890 = vadd.f32 %v888, %v889
    %v891 = vrot.slane %v890, 2
    %v892 = vadd.f32 %v890, %v891
    %v893 = vrot.slane %v892, 1
    %v894 = vadd.f32 %v892, %v893
    %v895 = vadd.f32 %v711, %v727
    %v896 = vadd.f32 %v895, %v743
    %v897 = vadd.f32 %v896, %v759
    %v898 = vrot.slane %v897, 4
    %v899 = vadd.f32 %v897, %v898
    %v900 = vrot.slane %v899, 2
    %v901 = vadd.f32 %v899, %v900
    %v902 = vrot.slane %v901, 1
    %v903 = vadd.f32 %v901, %v902
    %v904 = vmul.f32 %v195, 2.0
    %v905 = vmul.f32 %v197, 2.0
    %v906 = vmul.f32 %v266, 2.0
    %v907 = vmul.f32 %v268, 2.0
    %v908 = vmul.f32 %v337, 2.0
    %v909 = vmul.f32 %v339, 2.0
    %v910 = vmul.f32 %v408, 2.0
    %v911 = vmul.f32 %v410, 2.0
    %v912 = vmul.f32 %v479, 2.0
    %v913 = vmul.f32 %v481, 2.0
    %v914 = vmul.f32 %v550, 2.0
    %v915 = vmul.f32 %v552, 2.0
    %v916 = vmul.f32 %v621, 2.0
    %v917 = vmul.f32 %v623, 2.0
    %v918 = vmul.f32 %v692, 2.0
    %v919 = vmul.f32 %v694, 2.0
    %v920 = vsub.f32 %v904, %v768
    %v921 = vsub.f32 %v905, %v777
    %v922 = vsub.f32 %v906, %v786
    %v923 = vsub.f32 %v907, %v795
    %v924 = vsub.f32 %v908, %v804
    %v925 = vsub.f32 %v909, %v813
    %v926 = vsub.f32 %v910, %v822
    %v927 = vsub.f32 %v911, %v831
    %v928 = vsub.f32 %v912, %v840
    %v929 = vsub.f32 %v913, %v849
    %v930 = vsub.f32 %v914, %v858
    %v931 = vsub.f32 %v915, %v867
    %v932 = vsub.f32 %v916, %v876
    %v933 = vsub.f32 %v917, %v885
    %v934 = vsub.f32 %v918, %v894
    %v935 = vsub.f32 %v919, %v903
    %v936 = vmul.f32 %v920, 0.5
    %v937 = vmul.f32 %v921, 0.5
    %v938 = vmul.f32 %v922, 0.5
    %v939 = vmul.f32 %v923, 0.5
    %v940 = vmul.f32 %v924, 0.5
    %v941 = vmul.f32 %v925, 0.5
    %v942 = vmul.f32 %v926, 0.5
    %v943 = vmul.f32 %v927, 0.5
    %v944 = vmul.f32 %v928, 0.5
    %v945 = vmul.f32 %v929, 0.5
    %v946 = vmul.f32 %v930, 0.5
    %v947 = vmul.f32 %v931, 0.5
    %v948 = vmul.f32 %v932, 0.5
    %v949 = vmul.f32 %v933, 0.5
    %v950 = vmul.f32 %v934, 0.5
    %v951 = vmul.f32 %v935, 0.5
    %v952 = vld [vmem:[#allocation4] sm:$0xff]
    %v953 = vmax.f32 %v936, %v940
    %v954 = vmax.f32 %v937, %v941
    %v955 = vmax.f32 %v938, %v942
    %v956 = vmax.f32 %v939, %v943
    %v957 = vmax.f32 %v953, %v944
    %v958 = vmax.f32 %v954, %v945
    %v959 = vmax.f32 %v955, %v946
    %v960 = vmax.f32 %v956, %v947
    %v961 = vmax.f32 %v957, %v948
    %v962 = vmax.f32 %v958, %v949
    %v963 = vmax.f32 %v959, %v950
    %v964 = vmax.f32 %v960, %v951
    %v965 = vmax.f32 %v961, %v962
    %v966 = vmax.f32 %v963, %v964
    %v967 = vmax.f32 %v965, %v966
    %968 = vmax.xlane.f32.xlu0 %v967
    %v969 = vpop.xlane.xlu0 %968
    %v970 = vmax.f32 %v952, %v969
    %v971 = vsub.f32 %v952, %v970
    %v972 = vmul.f32 %v971, 1.442695
    %v973 = vpow.pop %v972
    %975 = vset.pattern.permute.xlu0 0
    %976 = vperm.xlu0 %975, %v970
    %v977 = vpop.permute.xlu0 %976
    %v979 = vsub.f32 %v936, %v977
    %v980 = vsub.f32 %v937, %v977
    %v981 = vsub.f32 %v938, %v977
    %v982 = vsub.f32 %v939, %v977
    %v983 = vsub.f32 %v940, %v977
    %v984 = vsub.f32 %v941, %v977
    %v985 = vsub.f32 %v942, %v977
    %v986 = vsub.f32 %v943, %v977
    %v987 = vsub.f32 %v944, %v977
    %v988 = vsub.f32 %v945, %v977
    %v989 = vsub.f32 %v946, %v977
    %v990 = vsub.f32 %v947, %v977
    %v991 = vsub.f32 %v948, %v977
    %v992 = vsub.f32 %v949, %v977
    %v993 = vsub.f32 %v950, %v977
    %v994 = vsub.f32 %v951, %v977
    %v995 = vmul.f32 %v979, 1.442695
    %v996 = vpow.pop %v995
    %v997 = vmul.f32 %v980, 1.442695
    %v998 = vpow.pop %v997
    %v999 = vmul.f32 %v981, 1.442695
    %v1000 = vpow.pop %v999
    %v1001 = vmul.f32 %v982, 1.442695
    %v1002 = vpow.pop %v1001
    %v1003 = vmul.f32 %v983, 1.442695
    %v1004 = vpow.pop %v1003
    %v1005 = vmul.f32 %v984, 1.442695
    %v1006 = vpow.pop %v1005
    %v1007 = vmul.f32 %v985, 1.442695
    %v1008 = vpow.pop %v1007
    %v1009 = vmul.f32 %v986, 1.442695
    %v1010 = vpow.pop %v1009
    %v1011 = vmul.f32 %v987, 1.442695
    %v1012 = vpow.pop %v1011
    %v1013 = vmul.f32 %v988, 1.442695
    %v1014 = vpow.pop %v1013
    %v1015 = vmul.f32 %v989, 1.442695
    %v1016 = vpow.pop %v1015
    %v1017 = vmul.f32 %v990, 1.442695
    %v1018 = vpow.pop %v1017
    %v1019 = vmul.f32 %v991, 1.442695
    %v1020 = vpow.pop %v1019
    %v1021 = vmul.f32 %v992, 1.442695
    %v1022 = vpow.pop %v1021
    %v1023 = vmul.f32 %v993, 1.442695
    %v1024 = vpow.pop %v1023
    %v1025 = vmul.f32 %v994, 1.442695
    %v1026 = vpow.pop %v1025
    %v1027 = vld [vmem:[#allocation3] sm:$0xff]
    %v1028 = vmul.f32 %v973, %v1027
    %v1029 = vadd.f32 %v996, %v998
    %v1030 = vadd.f32 %v1029, %v1000
    %v1031 = vadd.f32 %v1030, %v1002
    %v1032 = vadd.f32 %v1031, %v1004
    %v1033 = vadd.f32 %v1032, %v1006
    %v1034 = vadd.f32 %v1033, %v1008
    %v1035 = vadd.f32 %v1034, %v1010
    %v1036 = vadd.f32 %v1035, %v1012
    %v1037 = vadd.f32 %v1036, %v1014
    %v1038 = vadd.f32 %v1037, %v1016
    %v1039 = vadd.f32 %v1038, %v1018
    %v1040 = vadd.f32 %v1039, %v1020
    %v1041 = vadd.f32 %v1040, %v1022
    %v1042 = vadd.f32 %v1041, %v1024
    %v1043 = vadd.f32 %v1042, %v1026
    %1044 = vadd.xlane.f32.xlu0 %v1043
    %v1045 = vpop.xlane.xlu0 %1044
    %v1046 = vadd.f32 %v1028, %v1045
    %vm1047 = vcmask 7168
    %1048 = vst.msk [vmem:[#allocation3] sm:$0xff] %vm1047, %v1046
    %v1049 = vld [vmem:[#allocation2] sm:$0xff]
    %v1050 = vld [vmem:[#allocation2 + $0x8] sm:$0xff]
    %v1051 = vld [vmem:[#allocation2 + $0x10] sm:$0xff]
    %v1052 = vld [vmem:[#allocation2 + $0x18] sm:$0xff]
    %1053 = vxpose.xlu0.b32.start [1/16] %v973, 128
    %1054 = vxpose.xlu0.b32.cont [2/16] 0.0, 128
    %1055 = vxpose.xlu0.b32.cont [3/16] 0.0, 128
    %1056 = vxpose.xlu0.b32.cont [4/16] 0.0, 128
    %1057 = vxpose.xlu0.b32.cont [5/16] 0.0, 128
    %1058 = vxpose.xlu0.b32.cont [6/16] 0.0, 128
    %1059 = vxpose.xlu0.b32.cont [7/16] 0.0, 128
    %1060 = vxpose.xlu0.b32.cont [8/16] 0.0, 128
    %1061 = vxpose.xlu0.b32.cont [9/16] 0.0, 128
    %1062 = vxpose.xlu0.b32.cont [10/16] 0.0, 128
    %1063 = vxpose.xlu0.b32.cont [11/16] 0.0, 128
    %1064 = vxpose.xlu0.b32.cont [12/16] 0.0, 128
    %1065 = vxpose.xlu0.b32.cont [13/16] 0.0, 128
    %1066 = vxpose.xlu0.b32.cont [14/16] 0.0, 128
    %1067 = vxpose.xlu0.b32.cont [15/16] 0.0, 128
    %1068 = vxpose.xlu0.b32.end [16/16] 0.0, 128
    %v1069 = vpop.trf.xlu0
    %v1070 = vpop.trf.xlu0
    %v1071 = vpop.trf.xlu0
    %v1072 = vpop.trf.xlu0
    %v1073 = vpop.trf.xlu0
    %v1074 = vpop.trf.xlu0
    %v1075 = vpop.trf.xlu0
    %v1076 = vpop.trf.xlu0
    %v1077 = vpop.trf.xlu0
    %v1078 = vpop.trf.xlu0
    %v1079 = vpop.trf.xlu0
    %v1080 = vpop.trf.xlu0
    %v1081 = vpop.trf.xlu0
    %v1082 = vpop.trf.xlu0
    %v1083 = vpop.trf.xlu0
    %v1084 = vpop.trf.xlu0
    %v1085 = vlaneseq
    %v1086 = vshrl.u32 %v1085, 7
    %v1087 = vsub.s32 0, %v1086
    %v1088 = vrot.slane %v1069, %v1087
    %v1089 = vmul.f32 %v1049, %v1088
    %v1090 = vmul.f32 %v1050, %v1088
    %v1091 = vmul.f32 %v1051, %v1088
    %v1092 = vmul.f32 %v1052, %v1088
    %1093 = vmatprep.subr.mxu0 %v998
    %1094 = vmatpush1.xpose.msra.mxu0 %v996
    %1095 = vmatprep.subr.mxu0 0.0
    %1096 = vmatpush1.xpose.msra.mxu0 0.0
    %1097 = vmatprep.subr.mxu0 0.0
    %1098 = vmatpush1.xpose.msra.mxu0 0.0
    %1099 = vmatprep.subr.mxu0 0.0
    %1100 = vmatpush1.xpose.msra.mxu0 0.0
    %1101 = vmatprep.subr.mxu0 0.0
    %1102 = vmatpush1.xpose.msra.mxu0 0.0
    %1103 = vmatprep.subr.mxu0 0.0
    %1104 = vmatpush1.xpose.msra.mxu0 0.0
    %1105 = vmatprep.subr.mxu0 0.0
    %1106 = vmatpush1.xpose.msra.mxu0 0.0
    %1107 = vmatprep.subr.mxu0 0.0
    %1108 = vmatpush1.xpose.msra.mxu0 0.0
    %1109 = vmatprep.subr.mxu0 0.0
    %1110 = vmatpush1.xpose.msra.mxu0 0.0
    %1111 = vmatprep.subr.mxu0 0.0
    %1112 = vmatpush1.xpose.msra.mxu0 0.0
    %1113 = vmatprep.subr.mxu0 0.0
    %1114 = vmatpush1.xpose.msra.mxu0 0.0
    %1115 = vmatprep.subr.mxu0 0.0
    %1116 = vmatpush1.xpose.msra.mxu0 0.0
    %1117 = vmatprep.subr.mxu0 0.0
    %1118 = vmatpush1.xpose.msra.mxu0 0.0
    %1119 = vmatprep.subr.mxu0 0.0
    %1120 = vmatpush1.xpose.msra.mxu0 0.0
    %1121 = vmatprep.subr.mxu0 0.0
    %1122 = vmatpush1.xpose.msra.mxu0 0.0
    %1123 = vmatprep.subr.mxu0 0.0
    %1124 = vmatpush1.xpose.msra.mxu0 0.0
    %1125 = vmatprep.subr.mxu0 0.0
    %1126 = vmatpush1.xpose.msra.mxu0 0.0
    %1127 = vmatprep.subr.mxu0 0.0
    %1128 = vmatpush1.xpose.msra.mxu0 0.0
    %1129 = vmatprep.subr.mxu0 0.0
    %1130 = vmatpush1.xpose.msra.mxu0 0.0
    %1131 = vmatprep.subr.mxu0 0.0
    %1132 = vmatpush1.xpose.msra.mxu0 0.0
    %1133 = vmatprep.subr.mxu0 0.0
    %1134 = vmatpush1.xpose.msra.mxu0 0.0
    %1135 = vmatprep.subr.mxu0 0.0
    %1136 = vmatpush1.xpose.msra.mxu0 0.0
    %1137 = vmatprep.subr.mxu0 0.0
    %1138 = vmatpush1.xpose.msra.mxu0 0.0
    %1139 = vmatprep.subr.mxu0 0.0
    %1140 = vmatpush1.xpose.msra.mxu0 0.0
    %1141 = vmatprep.subr.mxu0 0.0
    %1142 = vmatpush1.xpose.msra.mxu0 0.0
    %1143 = vmatprep.subr.mxu0 0.0
    %1144 = vmatpush1.xpose.msra.mxu0 0.0
    %1145 = vmatprep.subr.mxu0 0.0
    %1146 = vmatpush1.xpose.msra.mxu0 0.0
    %1147 = vmatprep.subr.mxu0 0.0
    %1148 = vmatpush1.xpose.msra.mxu0 0.0
    %1149 = vmatprep.subr.mxu0 0.0
    %1150 = vmatpush1.xpose.msra.mxu0 0.0
    %1151 = vmatprep.subr.mxu0 0.0
    %1152 = vmatpush1.xpose.msra.mxu0 0.0
    %1153 = vmatprep.subr.mxu0 0.0
    %1154 = vmatpush1.xpose.msra.mxu0 0.0
    %1155 = vmatprep.subr.mxu0 0.0
    %1156 = vmatpush1.xpose.msra.mxu0 0.0
    %1157 = vmatprep.mubr.f32.mxu0 %v60
    %1158 = vmatmul.mubr.f32.gmra.mrb[0].mxu0 %v59
    %v1159 = vpop.f32.mrb[0].mxu0
    %v1160 = vadd.f32 0.0, %v1159
    %v1161 = vpop.f32.mrb[0].mxu0
    %1162 = vmatprep.mubr.f32.mxu0 %v76
    %1163 = vmatmul.mubr.f32.gmra.mrb[0].mxu0 %v75
    %v1164 = vpop.f32.mrb[0].mxu0
    %v1165 = vadd.f32 0.0, %v1164
    %v1166 = vpop.f32.mrb[0].mxu0
    %1167 = vmatprep.mubr.f32.mxu0 %v92
    %1168 = vmatmul.mubr.f32.gmra.mrb[0].mxu0 %v91
    %v1169 = vpop.f32.mrb[0].mxu0
    %v1170 = vadd.f32 0.0, %v1169
    %v1171 = vpop.f32.mrb[0].mxu0
    %1172 = vmatprep.mubr.f32.mxu0 %v108
    %1173 = vmatmul.mubr.f32.gmra.mrb[0].mxu0 %v107
    %v1174 = vpop.f32.mrb[0].mxu0
    %v1175 = vadd.f32 0.0, %v1174
    %v1176 = vpop.f32.mrb[0].mxu0
    %1177 = vdwg.mxu0
    %1178 = vmatprep.subr.mxu0 %v1002
    %1179 = vmatpush1.xpose.msra.mxu0 %v1000
    %1180 = vmatprep.subr.mxu0 0.0
    %1181 = vmatpush1.xpose.msra.mxu0 0.0
    %1182 = vmatprep.subr.mxu0 0.0
    %1183 = vmatpush1.xpose.msra.mxu0 0.0
    %1184 = vmatprep.subr.mxu0 0.0
    %1185 = vmatpush1.xpose.msra.mxu0 0.0
    %1186 = vmatprep.subr.mxu0 0.0
    %1187 = vmatpush1.xpose.msra.mxu0 0.0
    %1188 = vmatprep.subr.mxu0 0.0
    %1189 = vmatpush1.xpose.msra.mxu0 0.0
    %1190 = vmatprep.subr.mxu0 0.0
    %1191 = vmatpush1.xpose.msra.mxu0 0.0
    %1192 = vmatprep.subr.mxu0 0.0
    %1193 = vmatpush1.xpose.msra.mxu0 0.0
    %1194 = vmatprep.subr.mxu0 0.0
    %1195 = vmatpush1.xpose.msra.mxu0 0.0
    %1196 = vmatprep.subr.mxu0 0.0
    %1197 = vmatpush1.xpose.msra.mxu0 0.0
    %1198 = vmatprep.subr.mxu0 0.0
    %1199 = vmatpush1.xpose.msra.mxu0 0.0
    %1200 = vmatprep.subr.mxu0 0.0
    %1201 = vmatpush1.xpose.msra.mxu0 0.0
    %1202 = vmatprep.subr.mxu0 0.0
    %1203 = vmatpush1.xpose.msra.mxu0 0.0
    %1204 = vmatprep.subr.mxu0 0.0
    %1205 = vmatpush1.xpose.msra.mxu0 0.0
    %1206 = vmatprep.subr.mxu0 0.0
    %1207 = vmatpush1.xpose.msra.mxu0 0.0
    %1208 = vmatprep.subr.mxu0 0.0
    %1209 = vmatpush1.xpose.msra.mxu0 0.0
    %1210 = vmatprep.subr.mxu0 0.0
    %1211 = vmatpush1.xpose.msra.mxu0 0.0
    %1212 = vmatprep.subr.mxu0 0.0
    %1213 = vmatpush1.xpose.msra.mxu0 0.0
    %1214 = vmatprep.subr.mxu0 0.0
    %1215 = vmatpush1.xpose.msra.mxu0 0.0
    %1216 = vmatprep.subr.mxu0 0.0
    %1217 = vmatpush1.xpose.msra.mxu0 0.0
    %1218 = vmatprep.subr.mxu0 0.0
    %1219 = vmatpush1.xpose.msra.mxu0 0.0
    %1220 = vmatprep.subr.mxu0 0.0
    %1221 = vmatpush1.xpose.msra.mxu0 0.0
    %1222 = vmatprep.subr.mxu0 0.0
    %1223 = vmatpush1.xpose.msra.mxu0 0.0
    %1224 = vmatprep.subr.mxu0 0.0
    %1225 = vmatpush1.xpose.msra.mxu0 0.0
    %1226 = vmatprep.subr.mxu0 0.0
    %1227 = vmatpush1.xpose.msra.mxu0 0.0
    %1228 = vmatprep.subr.mxu0 0.0
    %1229 = vmatpush1.xpose.msra.mxu0 0.0
    %1230 = vmatprep.subr.mxu0 0.0
    %1231 = vmatpush1.xpose.msra.mxu0 0.0
    %1232 = vmatprep.subr.mxu0 0.0
    %1233 = vmatpush1.xpose.msra.mxu0 0.0
    %1234 = vmatprep.subr.mxu0 0.0
    %1235 = vmatpush1.xpose.msra.mxu0 0.0
    %1236 = vmatprep.subr.mxu0 0.0
    %1237 = vmatpush1.xpose.msra.mxu0 0.0
    %1238 = vmatprep.subr.mxu0 0.0
    %1239 = vmatpush1.xpose.msra.mxu0 0.0
    %1240 = vmatprep.subr.mxu0 0.0
    %1241 = vmatpush1.xpose.msra.mxu0 0.0
    %1242 = vmatprep.mubr.f32.mxu0 %v62
    %1243 = vmatmul.mubr.f32.gmra.mrb[0].mxu0 %v61
    %v1244 = vpop.f32.mrb[0].mxu0
    %v1245 = vadd.f32 %v1160, %v1244
    %v1246 = vpop.f32.mrb[0].mxu0
    %1247 = vmatprep.mubr.f32.mxu0 %v78
    %1248 = vmatmul.mubr.f32.gmra.mrb[0].mxu0 %v77
    %v1249 = vpop.f32.mrb[0].mxu0
    %v1250 = vadd.f32 %v1165, %v1249
    %v1251 = vpop.f32.mrb[0].mxu0
    %1252 = vmatprep.mubr.f32.mxu0 %v94
    %1253 = vmatmul.mubr.f32.gmra.mrb[0].mxu0 %v93
    %v1254 = vpop.f32.mrb[0].mxu0
    %v1255 = vadd.f32 %v1170, %v1254
    %v1256 = vpop.f32.mrb[0].mxu0
    %1257 = vmatprep.mubr.f32.mxu0 %v110
    %1258 = vmatmul.mubr.f32.gmra.mrb[0].mxu0 %v109
    %v1259 = vpop.f32.mrb[0].mxu0
    %v1260 = vadd.f32 %v1175, %v1259
    %v1261 = vpop.f32.mrb[0].mxu0
    %1262 = vdwg.mxu0
    %1263 = vmatprep.subr.mxu0 %v1006
    %1264 = vmatpush1.xpose.msra.mxu0 %v1004
    %1265 = vmatprep.subr.mxu0 0.0
    %1266 = vmatpush1.xpose.msra.mxu0 0.0
    %1267 = vmatprep.subr.mxu0 0.0
    %1268 = vmatpush1.xpose.msra.mxu0 0.0
    %1269 = vmatprep.subr.mxu0 0.0
    %1270 = vmatpush1.xpose.msra.mxu0 0.0
    %1271 = vmatprep.subr.mxu0 0.0
    %1272 = vmatpush1.xpose.msra.mxu0 0.0
    %1273 = vmatprep.subr.mxu0 0.0
    %1274 = vmatpush1.xpose.msra.mxu0 0.0
    %1275 = vmatprep.subr.mxu0 0.0
    %1276 = vmatpush1.xpose.msra.mxu0 0.0
    %1277 = vmatprep.subr.mxu0 0.0
    %1278 = vmatpush1.xpose.msra.mxu0 0.0
    %1279 = vmatprep.subr.mxu0 0.0
    %1280 = vmatpush1.xpose.msra.mxu0 0.0
    %1281 = vmatprep.subr.mxu0 0.0
    %1282 = vmatpush1.xpose.msra.mxu0 0.0
    %1283 = vmatprep.subr.mxu0 0.0
    %1284 = vmatpush1.xpose.msra.mxu0 0.0
    %1285 = vmatprep.subr.mxu0 0.0
    %1286 = vmatpush1.xpose.msra.mxu0 0.0
    %1287 = vmatprep.subr.mxu0 0.0
    %1288 = vmatpush1.xpose.msra.mxu0 0.0
    %1289 = vmatprep.subr.mxu0 0.0
    %1290 = vmatpush1.xpose.msra.mxu0 0.0
    %1291 = vmatprep.subr.mxu0 0.0
    %1292 = vmatpush1.xpose.msra.mxu0 0.0
    %1293 = vmatprep.subr.mxu0 0.0
    %1294 = vmatpush1.xpose.msra.mxu0 0.0
    %1295 = vmatprep.subr.mxu0 0.0
    %1296 = vmatpush1.xpose.msra.mxu0 0.0
    %1297 = vmatprep.subr.mxu0 0.0
    %1298 = vmatpush1.xpose.msra.mxu0 0.0
    %1299 = vmatprep.subr.mxu0 0.0
    %1300 = vmatpush1.xpose.msra.mxu0 0.0
    %1301 = vmatprep.subr.mxu0 0.0
    %1302 = vmatpush1.xpose.msra.mxu0 0.0
    %1303 = vmatprep.subr.mxu0 0.0
    %1304 = vmatpush1.xpose.msra.mxu0 0.0
    %1305 = vmatprep.subr.mxu0 0.0
    %1306 = vmatpush1.xpose.msra.mxu0 0.0
    %1307 = vmatprep.subr.mxu0 0.0
    %1308 = vmatpush1.xpose.msra.mxu0 0.0
    %1309 = vmatprep.subr.mxu0 0.0
    %1310 = vmatpush1.xpose.msra.mxu0 0.0
    %1311 = vmatprep.subr.mxu0 0.0
    %1312 = vmatpush1.xpose.msra.mxu0 0.0
    %1313 = vmatprep.subr.mxu0 0.0
    %1314 = vmatpush1.xpose.msra.mxu0 0.0
    %1315 = vmatprep.subr.mxu0 0.0
    %1316 = vmatpush1.xpose.msra.mxu0 0.0
    %1317 = vmatprep.subr.mxu0 0.0
    %1318 = vmatpush1.xpose.msra.mxu0 0.0
    %1319 = vmatprep.subr.mxu0 0.0
    %1320 = vmatpush1.xpose.msra.mxu0 0.0
    %1321 = vmatprep.subr.mxu0 0.0
    %1322 = vmatpush1.xpose.msra.mxu0 0.0
    %1323 = vmatprep.subr.mxu0 0.0
    %1324 = vmatpush1.xpose.msra.mxu0 0.0
    %1325 = vmatprep.subr.mxu0 0.0
    %1326 = vmatpush1.xpose.msra.mxu0 0.0
    %1327 = vmatprep.mubr.f32.mxu0 %v64
    %1328 = vmatmul.mubr.f32.gmra.mrb[0].mxu0 %v63
    %v1329 = vpop.f32.mrb[0].mxu0
    %v1330 = vadd.f32 %v1245, %v1329
    %v1331 = vpop.f32.mrb[0].mxu0
    %1332 = vmatprep.mubr.f32.mxu0 %v80
    %1333 = vmatmul.mubr.f32.gmra.mrb[0].mxu0 %v79
    %v1334 = vpop.f32.mrb[0].mxu0
    %v1335 = vadd.f32 %v1250, %v1334
    %v1336 = vpop.f32.mrb[0].mxu0
    %1337 = vmatprep.mubr.f32.mxu0 %v96
    %1338 = vmatmul.mubr.f32.gmra.mrb[0].mxu0 %v95
    %v1339 = vpop.f32.mrb[0].mxu0
    %v1340 = vadd.f32 %v1255, %v1339
    %v1341 = vpop.f32.mrb[0].mxu0
    %1342 = vmatprep.mubr.f32.mxu0 %v112
    %1343 = vmatmul.mubr.f32.gmra.mrb[0].mxu0 %v111
    %v1344 = vpop.f32.mrb[0].mxu0
    %v1345 = vadd.f32 %v1260, %v1344
    %v1346 = vpop.f32.mrb[0].mxu0
    %1347 = vdwg.mxu0
    %1348 = vmatprep.subr.mxu0 %v1010
    %1349 = vmatpush1.xpose.msra.mxu0 %v1008
    %1350 = vmatprep.subr.mxu0 0.0
    %1351 = vmatpush1.xpose.msra.mxu0 0.0
    %1352 = vmatprep.subr.mxu0 0.0
    %1353 = vmatpush1.xpose.msra.mxu0 0.0
    %1354 = vmatprep.subr.mxu0 0.0
    %1355 = vmatpush1.xpose.msra.mxu0 0.0
    %1356 = vmatprep.subr.mxu0 0.0
    %1357 = vmatpush1.xpose.msra.mxu0 0.0
    %1358 = vmatprep.subr.mxu0 0.0
    %1359 = vmatpush1.xpose.msra.mxu0 0.0
    %1360 = vmatprep.subr.mxu0 0.0
    %1361 = vmatpush1.xpose.msra.mxu0 0.0
    %1362 = vmatprep.subr.mxu0 0.0
    %1363 = vmatpush1.xpose.msra.mxu0 0.0
    %1364 = vmatprep.subr.mxu0 0.0
    %1365 = vmatpush1.xpose.msra.mxu0 0.0
    %1366 = vmatprep.subr.mxu0 0.0
    %1367 = vmatpush1.xpose.msra.mxu0 0.0
    %1368 = vmatprep.subr.mxu0 0.0
    %1369 = vmatpush1.xpose.msra.mxu0 0.0
    %1370 = vmatprep.subr.mxu0 0.0
    %1371 = vmatpush1.xpose.msra.mxu0 0.0
    %1372 = vmatprep.subr.mxu0 0.0
    %1373 = vmatpush1.xpose.msra.mxu0 0.0
    %1374 = vmatprep.subr.mxu0 0.0
    %1375 = vmatpush1.xpose.msra.mxu0 0.0
    %1376 = vmatprep.subr.mxu0 0.0
    %1377 = vmatpush1.xpose.msra.mxu0 0.0
    %1378 = vmatprep.subr.mxu0 0.0
    %1379 = vmatpush1.xpose.msra.mxu0 0.0
    %1380 = vmatprep.subr.mxu0 0.0
    %1381 = vmatpush1.xpose.msra.mxu0 0.0
    %1382 = vmatprep.subr.mxu0 0.0
    %1383 = vmatpush1.xpose.msra.mxu0 0.0
    %1384 = vmatprep.subr.mxu0 0.0
    %1385 = vmatpush1.xpose.msra.mxu0 0.0
    %1386 = vmatprep.subr.mxu0 0.0
    %1387 = vmatpush1.xpose.msra.mxu0 0.0
    %1388 = vmatprep.subr.mxu0 0.0
    %1389 = vmatpush1.xpose.msra.mxu0 0.0
    %1390 = vmatprep.subr.mxu0 0.0
    %1391 = vmatpush1.xpose.msra.mxu0 0.0
    %1392 = vmatprep.subr.mxu0 0.0
    %1393 = vmatpush1.xpose.msra.mxu0 0.0
    %1394 = vmatprep.subr.mxu0 0.0
    %1395 = vmatpush1.xpose.msra.mxu0 0.0
    %1396 = vmatprep.subr.mxu0 0.0
    %1397 = vmatpush1.xpose.msra.mxu0 0.0
    %1398 = vmatprep.subr.mxu0 0.0
    %1399 = vmatpush1.xpose.msra.mxu0 0.0
    %1400 = vmatprep.subr.mxu0 0.0
    %1401 = vmatpush1.xpose.msra.mxu0 0.0
    %1402 = vmatprep.subr.mxu0 0.0
    %1403 = vmatpush1.xpose.msra.mxu0 0.0
    %1404 = vmatprep.subr.mxu0 0.0
    %1405 = vmatpush1.xpose.msra.mxu0 0.0
    %1406 = vmatprep.subr.mxu0 0.0
    %1407 = vmatpush1.xpose.msra.mxu0 0.0
    %1408 = vmatprep.subr.mxu0 0.0
    %1409 = vmatpush1.xpose.msra.mxu0 0.0
    %1410 = vmatprep.subr.mxu0 0.0
    %1411 = vmatpush1.xpose.msra.mxu0 0.0
    %1412 = vmatprep.mubr.f32.mxu0 %v66
    %1413 = vmatmul.mubr.f32.gmra.mrb[0].mxu0 %v65
    %v1414 = vpop.f32.mrb[0].mxu0
    %v1415 = vadd.f32 %v1330, %v1414
    %v1416 = vpop.f32.mrb[0].mxu0
    %1417 = vmatprep.mubr.f32.mxu0 %v82
    %1418 = vmatmul.mubr.f32.gmra.mrb[0].mxu0 %v81
    %v1419 = vpop.f32.mrb[0].mxu0
    %v1420 = vadd.f32 %v1335, %v1419
    %v1421 = vpop.f32.mrb[0].mxu0
    %1422 = vmatprep.mubr.f32.mxu0 %v98
    %1423 = vmatmul.mubr.f32.gmra.mrb[0].mxu0 %v97
    %v1424 = vpop.f32.mrb[0].mxu0
    %v1425 = vadd.f32 %v1340, %v1424
    %v1426 = vpop.f32.mrb[0].mxu0
    %1427 = vmatprep.mubr.f32.mxu0 %v114
    %1428 = vmatmul.mubr.f32.gmra.mrb[0].mxu0 %v113
    %v1429 = vpop.f32.mrb[0].mxu0
    %v1430 = vadd.f32 %v1345, %v1429
    %v1431 = vpop.f32.mrb[0].mxu0
    %1432 = vdwg.mxu0
    %1433 = vmatprep.subr.mxu0 %v1014
    %1434 = vmatpush1.xpose.msra.mxu0 %v1012
    %1435 = vmatprep.subr.mxu0 0.0
    %1436 = vmatpush1.xpose.msra.mxu0 0.0
    %1437 = vmatprep.subr.mxu0 0.0
    %1438 = vmatpush1.xpose.msra.mxu0 0.0
    %1439 = vmatprep.subr.mxu0 0.0
    %1440 = vmatpush1.xpose.msra.mxu0 0.0
    %1441 = vmatprep.subr.mxu0 0.0
    %1442 = vmatpush1.xpose.msra.mxu0 0.0
    %1443 = vmatprep.subr.mxu0 0.0
    %1444 = vmatpush1.xpose.msra.mxu0 0.0
    %1445 = vmatprep.subr.mxu0 0.0
    %1446 = vmatpush1.xpose.msra.mxu0 0.0
    %1447 = vmatprep.subr.mxu0 0.0
    %1448 = vmatpush1.xpose.msra.mxu0 0.0
    %1449 = vmatprep.subr.mxu0 0.0
    %1450 = vmatpush1.xpose.msra.mxu0 0.0
    %1451 = vmatprep.subr.mxu0 0.0
    %1452 = vmatpush1.xpose.msra.mxu0 0.0
    %1453 = vmatprep.subr.mxu0 0.0
    %1454 = vmatpush1.xpose.msra.mxu0 0.0
    %1455 = vmatprep.subr.mxu0 0.0
    %1456 = vmatpush1.xpose.msra.mxu0 0.0
    %1457 = vmatprep.subr.mxu0 0.0
    %1458 = vmatpush1.xpose.msra.mxu0 0.0
    %1459 = vmatprep.subr.mxu0 0.0
    %1460 = vmatpush1.xpose.msra.mxu0 0.0
    %1461 = vmatprep.subr.mxu0 0.0
    %1462 = vmatpush1.xpose.msra.mxu0 0.0
    %1463 = vmatprep.subr.mxu0 0.0
    %1464 = vmatpush1.xpose.msra.mxu0 0.0
    %1465 = vmatprep.subr.mxu0 0.0
    %1466 = vmatpush1.xpose.msra.mxu0 0.0
    %1467 = vmatprep.subr.mxu0 0.0
    %1468 = vmatpush1.xpose.msra.mxu0 0.0
    %1469 = vmatprep.subr.mxu0 0.0
    %1470 = vmatpush1.xpose.msra.mxu0 0.0
    %1471 = vmatprep.subr.mxu0 0.0
    %1472 = vmatpush1.xpose.msra.mxu0 0.0
    %1473 = vmatprep.subr.mxu0 0.0
    %1474 = vmatpush1.xpose.msra.mxu0 0.0
    %1475 = vmatprep.subr.mxu0 0.0
    %1476 = vmatpush1.xpose.msra.mxu0 0.0
    %1477 = vmatprep.subr.mxu0 0.0
    %1478 = vmatpush1.xpose.msra.mxu0 0.0
    %1479 = vmatprep.subr.mxu0 0.0
    %1480 = vmatpush1.xpose.msra.mxu0 0.0
    %1481 = vmatprep.subr.mxu0 0.0
    %1482 = vmatpush1.xpose.msra.mxu0 0.0
    %1483 = vmatprep.subr.mxu0 0.0
    %1484 = vmatpush1.xpose.msra.mxu0 0.0
    %1485 = vmatprep.subr.mxu0 0.0
    %1486 = vmatpush1.xpose.msra.mxu0 0.0
    %1487 = vmatprep.subr.mxu0 0.0
    %1488 = vmatpush1.xpose.msra.mxu0 0.0
    %1489 = vmatprep.subr.mxu0 0.0
    %1490 = vmatpush1.xpose.msra.mxu0 0.0
    %1491 = vmatprep.subr.mxu0 0.0
    %1492 = vmatpush1.xpose.msra.mxu0 0.0
    %1493 = vmatprep.subr.mxu0 0.0
    %1494 = vmatpush1.xpose.msra.mxu0 0.0
    %1495 = vmatprep.subr.mxu0 0.0
    %1496 = vmatpush1.xpose.msra.mxu0 0.0
    %1497 = vmatprep.mubr.f32.mxu0 %v68
    %1498 = vmatmul.mubr.f32.gmra.mrb[0].mxu0 %v67
    %v1499 = vpop.f32.mrb[0].mxu0
    %v1500 = vadd.f32 %v1415, %v1499
    %v1501 = vpop.f32.mrb[0].mxu0
    %1502 = vmatprep.mubr.f32.mxu0 %v84
    %1503 = vmatmul.mubr.f32.gmra.mrb[0].mxu0 %v83
    %v1504 = vpop.f32.mrb[0].mxu0
    %v1505 = vadd.f32 %v1420, %v1504
    %v1506 = vpop.f32.mrb[0].mxu0
    %1507 = vmatprep.mubr.f32.mxu0 %v100
    %1508 = vmatmul.mubr.f32.gmra.mrb[0].mxu0 %v99
    %v1509 = vpop.f32.mrb[0].mxu0
    %v1510 = vadd.f32 %v1425, %v1509
    %v1511 = vpop.f32.mrb[0].mxu0
    %1512 = vmatprep.mubr.f32.mxu0 %v116
    %1513 = vmatmul.mubr.f32.gmra.mrb[0].mxu0 %v115
    %v1514 = vpop.f32.mrb[0].mxu0
    %v1515 = vadd.f32 %v1430, %v1514
    %v1516 = vpop.f32.mrb[0].mxu0
    %1517 = vdwg.mxu0
    %1518 = vmatprep.subr.mxu0 %v1018
    %1519 = vmatpush1.xpose.msra.mxu0 %v1016
    %1520 = vmatprep.subr.mxu0 0.0
    %1521 = vmatpush1.xpose.msra.mxu0 0.0
    %1522 = vmatprep.subr.mxu0 0.0
    %1523 = vmatpush1.xpose.msra.mxu0 0.0
    %1524 = vmatprep.subr.mxu0 0.0
    %1525 = vmatpush1.xpose.msra.mxu0 0.0
    %1526 = vmatprep.subr.mxu0 0.0
    %1527 = vmatpush1.xpose.msra.mxu0 0.0
    %1528 = vmatprep.subr.mxu0 0.0
    %1529 = vmatpush1.xpose.msra.mxu0 0.0
    %1530 = vmatprep.subr.mxu0 0.0
    %1531 = vmatpush1.xpose.msra.mxu0 0.0
    %1532 = vmatprep.subr.mxu0 0.0
    %1533 = vmatpush1.xpose.msra.mxu0 0.0
    %1534 = vmatprep.subr.mxu0 0.0
    %1535 = vmatpush1.xpose.msra.mxu0 0.0
    %1536 = vmatprep.subr.mxu0 0.0
    %1537 = vmatpush1.xpose.msra.mxu0 0.0
    %1538 = vmatprep.subr.mxu0 0.0
    %1539 = vmatpush1.xpose.msra.mxu0 0.0
    %1540 = vmatprep.subr.mxu0 0.0
    %1541 = vmatpush1.xpose.msra.mxu0 0.0
    %1542 = vmatprep.subr.mxu0 0.0
    %1543 = vmatpush1.xpose.msra.mxu0 0.0
    %1544 = vmatprep.subr.mxu0 0.0
    %1545 = vmatpush1.xpose.msra.mxu0 0.0
    %1546 = vmatprep.subr.mxu0 0.0
    %1547 = vmatpush1.xpose.msra.mxu0 0.0
    %1548 = vmatprep.subr.mxu0 0.0
    %1549 = vmatpush1.xpose.msra.mxu0 0.0
    %1550 = vmatprep.subr.mxu0 0.0
    %1551 = vmatpush1.xpose.msra.mxu0 0.0
    %1552 = vmatprep.subr.mxu0 0.0
    %1553 = vmatpush1.xpose.msra.mxu0 0.0
    %1554 = vmatprep.subr.mxu0 0.0
    %1555 = vmatpush1.xpose.msra.mxu0 0.0
    %1556 = vmatprep.subr.mxu0 0.0
    %1557 = vmatpush1.xpose.msra.mxu0 0.0
    %1558 = vmatprep.subr.mxu0 0.0
    %1559 = vmatpush1.xpose.msra.mxu0 0.0
    %1560 = vmatprep.subr.mxu0 0.0
    %1561 = vmatpush1.xpose.msra.mxu0 0.0
    %1562 = vmatprep.subr.mxu0 0.0
    %1563 = vmatpush1.xpose.msra.mxu0 0.0
    %1564 = vmatprep.subr.mxu0 0.0
    %1565 = vmatpush1.xpose.msra.mxu0 0.0
    %1566 = vmatprep.subr.mxu0 0.0
    %1567 = vmatpush1.xpose.msra.mxu0 0.0
    %1568 = vmatprep.subr.mxu0 0.0
    %1569 = vmatpush1.xpose.msra.mxu0 0.0
    %1570 = vmatprep.subr.mxu0 0.0
    %1571 = vmatpush1.xpose.msra.mxu0 0.0
    %1572 = vmatprep.subr.mxu0 0.0
    %1573 = vmatpush1.xpose.msra.mxu0 0.0
    %1574 = vmatprep.subr.mxu0 0.0
    %1575 = vmatpush1.xpose.msra.mxu0 0.0
    %1576 = vmatprep.subr.mxu0 0.0
    %1577 = vmatpush1.xpose.msra.mxu0 0.0
    %1578 = vmatprep.subr.mxu0 0.0
    %1579 = vmatpush1.xpose.msra.mxu0 0.0
    %1580 = vmatprep.subr.mxu0 0.0
    %1581 = vmatpush1.xpose.msra.mxu0 0.0
    %1582 = vmatprep.mubr.f32.mxu0 %v70
    %1583 = vmatmul.mubr.f32.gmra.mrb[0].mxu0 %v69
    %v1584 = vpop.f32.mrb[0].mxu0
    %v1585 = vadd.f32 %v1500, %v1584
    %v1586 = vpop.f32.mrb[0].mxu0
    %1587 = vmatprep.mubr.f32.mxu0 %v86
    %1588 = vmatmul.mubr.f32.gmra.mrb[0].mxu0 %v85
    %v1589 = vpop.f32.mrb[0].mxu0
    %v1590 = vadd.f32 %v1505, %v1589
    %v1591 = vpop.f32.mrb[0].mxu0
    %1592 = vmatprep.mubr.f32.mxu0 %v102
    %1593 = vmatmul.mubr.f32.gmra.mrb[0].mxu0 %v101
    %v1594 = vpop.f32.mrb[0].mxu0
    %v1595 = vadd.f32 %v1510, %v1594
    %v1596 = vpop.f32.mrb[0].mxu0
    %1597 = vmatprep.mubr.f32.mxu0 %v118
    %1598 = vmatmul.mubr.f32.gmra.mrb[0].mxu0 %v117
    %v1599 = vpop.f32.mrb[0].mxu0
    %v1600 = vadd.f32 %v1515, %v1599
    %v1601 = vpop.f32.mrb[0].mxu0
    %1602 = vdwg.mxu0
    %1603 = vmatprep.subr.mxu0 %v1022
    %1604 = vmatpush1.xpose.msra.mxu0 %v1020
    %1605 = vmatprep.subr.mxu0 0.0
    %1606 = vmatpush1.xpose.msra.mxu0 0.0
    %1607 = vmatprep.subr.mxu0 0.0
    %1608 = vmatpush1.xpose.msra.mxu0 0.0
    %1609 = vmatprep.subr.mxu0 0.0
    %1610 = vmatpush1.xpose.msra.mxu0 0.0
    %1611 = vmatprep.subr.mxu0 0.0
    %1612 = vmatpush1.xpose.msra.mxu0 0.0
    %1613 = vmatprep.subr.mxu0 0.0
    %1614 = vmatpush1.xpose.msra.mxu0 0.0
    %1615 = vmatprep.subr.mxu0 0.0
    %1616 = vmatpush1.xpose.msra.mxu0 0.0
    %1617 = vmatprep.subr.mxu0 0.0
    %1618 = vmatpush1.xpose.msra.mxu0 0.0
    %1619 = vmatprep.subr.mxu0 0.0
    %1620 = vmatpush1.xpose.msra.mxu0 0.0
    %1621 = vmatprep.subr.mxu0 0.0
    %1622 = vmatpush1.xpose.msra.mxu0 0.0
    %1623 = vmatprep.subr.mxu0 0.0
    %1624 = vmatpush1.xpose.msra.mxu0 0.0
    %1625 = vmatprep.subr.mxu0 0.0
    %1626 = vmatpush1.xpose.msra.mxu0 0.0
    %1627 = vmatprep.subr.mxu0 0.0
    %1628 = vmatpush1.xpose.msra.mxu0 0.0
    %1629 = vmatprep.subr.mxu0 0.0
    %1630 = vmatpush1.xpose.msra.mxu0 0.0
    %1631 = vmatprep.subr.mxu0 0.0
    %1632 = vmatpush1.xpose.msra.mxu0 0.0
    %1633 = vmatprep.subr.mxu0 0.0
    %1634 = vmatpush1.xpose.msra.mxu0 0.0
    %1635 = vmatprep.subr.mxu0 0.0
    %1636 = vmatpush1.xpose.msra.mxu0 0.0
    %1637 = vmatprep.subr.mxu0 0.0
    %1638 = vmatpush1.xpose.msra.mxu0 0.0
    %1639 = vmatprep.subr.mxu0 0.0
    %1640 = vmatpush1.xpose.msra.mxu0 0.0
    %1641 = vmatprep.subr.mxu0 0.0
    %1642 = vmatpush1.xpose.msra.mxu0 0.0
    %1643 = vmatprep.subr.mxu0 0.0
    %1644 = vmatpush1.xpose.msra.mxu0 0.0
    %1645 = vmatprep.subr.mxu0 0.0
    %1646 = vmatpush1.xpose.msra.mxu0 0.0
    %1647 = vmatprep.subr.mxu0 0.0
    %1648 = vmatpush1.xpose.msra.mxu0 0.0
    %1649 = vmatprep.subr.mxu0 0.0
    %1650 = vmatpush1.xpose.msra.mxu0 0.0
    %1651 = vmatprep.subr.mxu0 0.0
    %1652 = vmatpush1.xpose.msra.mxu0 0.0
    %1653 = vmatprep.subr.mxu0 0.0
    %1654 = vmatpush1.xpose.msra.mxu0 0.0
    %1655 = vmatprep.subr.mxu0 0.0
    %1656 = vmatpush1.xpose.msra.mxu0 0.0
    %1657 = vmatprep.subr.mxu0 0.0
    %1658 = vmatpush1.xpose.msra.mxu0 0.0
    %1659 = vmatprep.subr.mxu0 0.0
    %1660 = vmatpush1.xpose.msra.mxu0 0.0
    %1661 = vmatprep.subr.mxu0 0.0
    %1662 = vmatpush1.xpose.msra.mxu0 0.0
    %1663 = vmatprep.subr.mxu0 0.0
    %1664 = vmatpush1.xpose.msra.mxu0 0.0
    %1665 = vmatprep.subr.mxu0 0.0
    %1666 = vmatpush1.xpose.msra.mxu0 0.0
    %1667 = vmatprep.mubr.f32.mxu0 %v72
    %1668 = vmatmul.mubr.f32.gmra.mrb[0].mxu0 %v71
    %v1669 = vpop.f32.mrb[0].mxu0
    %v1670 = vadd.f32 %v1585, %v1669
    %v1671 = vpop.f32.mrb[0].mxu0
    %1672 = vmatprep.mubr.f32.mxu0 %v88
    %1673 = vmatmul.mubr.f32.gmra.mrb[0].mxu0 %v87
    %v1674 = vpop.f32.mrb[0].mxu0
    %v1675 = vadd.f32 %v1590, %v1674
    %v1676 = vpop.f32.mrb[0].mxu0
    %1677 = vmatprep.mubr.f32.mxu0 %v104
    %1678 = vmatmul.mubr.f32.gmra.mrb[0].mxu0 %v103
    %v1679 = vpop.f32.mrb[0].mxu0
    %v1680 = vadd.f32 %v1595, %v1679
    %v1681 = vpop.f32.mrb[0].mxu0
    %1682 = vmatprep.mubr.f32.mxu0 %v120
    %1683 = vmatmul.mubr.f32.gmra.mrb[0].mxu0 %v119
    %v1684 = vpop.f32.mrb[0].mxu0
    %v1685 = vadd.f32 %v1600, %v1684
    %v1686 = vpop.f32.mrb[0].mxu0
    %1687 = vdwg.mxu0
    %1688 = vmatprep.subr.mxu0 %v1026
    %1689 = vmatpush1.xpose.msra.mxu0 %v1024
    %1690 = vmatprep.subr.mxu0 0.0
    %1691 = vmatpush1.xpose.msra.mxu0 0.0
    %1692 = vmatprep.subr.mxu0 0.0
    %1693 = vmatpush1.xpose.msra.mxu0 0.0
    %1694 = vmatprep.subr.mxu0 0.0
    %1695 = vmatpush1.xpose.msra.mxu0 0.0
    %1696 = vmatprep.subr.mxu0 0.0
    %1697 = vmatpush1.xpose.msra.mxu0 0.0
    %1698 = vmatprep.subr.mxu0 0.0
    %1699 = vmatpush1.xpose.msra.mxu0 0.0
    %1700 = vmatprep.subr.mxu0 0.0
    %1701 = vmatpush1.xpose.msra.mxu0 0.0
    %1702 = vmatprep.subr.mxu0 0.0
    %1703 = vmatpush1.xpose.msra.mxu0 0.0
    %1704 = vmatprep.subr.mxu0 0.0
    %1705 = vmatpush1.xpose.msra.mxu0 0.0
    %1706 = vmatprep.subr.mxu0 0.0
    %1707 = vmatpush1.xpose.msra.mxu0 0.0
    %1708 = vmatprep.subr.mxu0 0.0
    %1709 = vmatpush1.xpose.msra.mxu0 0.0
    %1710 = vmatprep.subr.mxu0 0.0
    %1711 = vmatpush1.xpose.msra.mxu0 0.0
    %1712 = vmatprep.subr.mxu0 0.0
    %1713 = vmatpush1.xpose.msra.mxu0 0.0
    %1714 = vmatprep.subr.mxu0 0.0
    %1715 = vmatpush1.xpose.msra.mxu0 0.0
    %1716 = vmatprep.subr.mxu0 0.0
    %1717 = vmatpush1.xpose.msra.mxu0 0.0
    %1718 = vmatprep.subr.mxu0 0.0
    %1719 = vmatpush1.xpose.msra.mxu0 0.0
    %1720 = vmatprep.subr.mxu0 0.0
    %1721 = vmatpush1.xpose.msra.mxu0 0.0
    %1722 = vmatprep.subr.mxu0 0.0
    %1723 = vmatpush1.xpose.msra.mxu0 0.0
    %1724 = vmatprep.subr.mxu0 0.0
    %1725 = vmatpush1.xpose.msra.mxu0 0.0
    %1726 = vmatprep.subr.mxu0 0.0
    %1727 = vmatpush1.xpose.msra.mxu0 0.0
    %1728 = vmatprep.subr.mxu0 0.0
    %1729 = vmatpush1.xpose.msra.mxu0 0.0
    %1730 = vmatprep.subr.mxu0 0.0
    %1731 = vmatpush1.xpose.msra.mxu0 0.0
    %1732 = vmatprep.subr.mxu0 0.0
    %1733 = vmatpush1.xpose.msra.mxu0 0.0
    %1734 = vmatprep.subr.mxu0 0.0
    %1735 = vmatpush1.xpose.msra.mxu0 0.0
    %1736 = vmatprep.subr.mxu0 0.0
    %1737 = vmatpush1.xpose.msra.mxu0 0.0
    %1738 = vmatprep.subr.mxu0 0.0
    %1739 = vmatpush1.xpose.msra.mxu0 0.0
    %1740 = vmatprep.subr.mxu0 0.0
    %1741 = vmatpush1.xpose.msra.mxu0 0.0
    %1742 = vmatprep.subr.mxu0 0.0
    %1743 = vmatpush1.xpose.msra.mxu0 0.0
    %1744 = vmatprep.subr.mxu0 0.0
    %1745 = vmatpush1.xpose.msra.mxu0 0.0
    %1746 = vmatprep.subr.mxu0 0.0
    %1747 = vmatpush1.xpose.msra.mxu0 0.0
    %1748 = vmatprep.subr.mxu0 0.0
    %1749 = vmatpush1.xpose.msra.mxu0 0.0
    %1750 = vmatprep.subr.mxu0 0.0
    %1751 = vmatpush1.xpose.msra.mxu0 0.0
    %1752 = vmatprep.mubr.f32.mxu0 %v74
    %1753 = vmatmul.mubr.f32.gmra.mrb[0].mxu0 %v73
    %v1754 = vpop.f32.mrb[0].mxu0
    %v1755 = vadd.f32 %v1670, %v1754
    %v1756 = vpop.f32.mrb[0].mxu0
    %1757 = vmatprep.mubr.f32.mxu0 %v90
    %1758 = vmatmul.mubr.f32.gmra.mrb[0].mxu0 %v89
    %v1759 = vpop.f32.mrb[0].mxu0
    %v1760 = vadd.f32 %v1675, %v1759
    %v1761 = vpop.f32.mrb[0].mxu0
    %1762 = vmatprep.mubr.f32.mxu0 %v106
    %1763 = vmatmul.mubr.f32.gmra.mrb[0].mxu0 %v105
    %v1764 = vpop.f32.mrb[0].mxu0
    %v1765 = vadd.f32 %v1680, %v1764
    %v1766 = vpop.f32.mrb[0].mxu0
    %1767 = vmatprep.mubr.f32.mxu0 %v122
    %1768 = vmatmul.mubr.f32.gmra.mrb[0].mxu0 %v121
    %v1769 = vpop.f32.mrb[0].mxu0
    %v1770 = vadd.f32 %v1685, %v1769
    %v1771 = vpop.f32.mrb[0].mxu0
    %1772 = vdwg.mxu0
    %v1773 = vadd.f32 %v1089, %v1755
    %v1774 = vadd.f32 %v1090, %v1760
    %v1775 = vadd.f32 %v1091, %v1765
    %v1776 = vadd.f32 %v1092, %v1770
    %vm1777 = vcmask 64512
    %1778 = vst.msk [vmem:[#allocation2] sm:$0xff] %vm1777, %v1773
    %1779 = vst.msk [vmem:[#allocation2 + $0x8] sm:$0xff] %vm1777, %v1774
    %1780 = vst.msk [vmem:[#allocation2 + $0x10] sm:$0xff] %vm1777, %v1775
    %1781 = vst.msk [vmem:[#allocation2 + $0x18] sm:$0xff] %vm1777, %v1776
    %1782 = vst.msk [vmem:[#allocation4] sm:$0xff] %vm1047, %v970
    // Predicated region
    $region22: #{tpu_custom_call.1} parent=1 // pred_check
      %p1783 = pneg %p47
    $region23: #{tpu_custom_call.1} parent=1 // pred_check_branch
      %1785 = sbr.rel (%p1783) target = $region25
    $region24: #{tpu_custom_call.1} parent=1 // pred_region
      %v1786 = vld [vmem:[#allocation2] sm:$0xff]
      %v1787 = vld [vmem:[#allocation2 + $0x8] sm:$0xff]
      %v1788 = vld [vmem:[#allocation2 + $0x10] sm:$0xff]
      %v1789 = vld [vmem:[#allocation2 + $0x18] sm:$0xff]
      %1790 = vxpose.xlu0.b32.start [1/16] %v1786, 128
      %1791 = vxpose.xlu0.b32.cont [2/16] %v1787, 128
      %1792 = vxpose.xlu0.b32.cont [3/16] %v1788, 128
      %1793 = vxpose.xlu0.b32.cont [4/16] %v1789, 128
      %1794 = vxpose.xlu0.b32.cont [5/16] 0.0, 128
      %1795 = vxpose.xlu0.b32.cont [6/16] 0.0, 128
      %1796 = vxpose.xlu0.b32.cont [7/16] 0.0, 128
      %1797 = vxpose.xlu0.b32.cont [8/16] 0.0, 128
      %1798 = vxpose.xlu0.b32.cont [9/16] 0.0, 128
      %1799 = vxpose.xlu0.b32.cont [10/16] 0.0, 128
      %1800 = vxpose.xlu0.b32.cont [11/16] 0.0, 128
      %1801 = vxpose.xlu0.b32.cont [12/16] 0.0, 128
      %1802 = vxpose.xlu0.b32.cont [13/16] 0.0, 128
      %1803 = vxpose.xlu0.b32.cont [14/16] 0.0, 128
      %1804 = vxpose.xlu0.b32.cont [15/16] 0.0, 128
      %1805 = vxpose.xlu0.b32.end [16/16] 0.0, 128
      %v1806 = vpop.trf.xlu0
      %v1807 = vpop.trf.xlu0
      %v1808 = vpop.trf.xlu0
      %v1809 = vpop.trf.xlu0
      %v1810 = vpop.trf.xlu0
      %v1811 = vpop.trf.xlu0
      %v1812 = vpop.trf.xlu0
      %v1813 = vpop.trf.xlu0
      %v1814 = vpop.trf.xlu0
      %v1815 = vpop.trf.xlu0
      %v1816 = vpop.trf.xlu0
      %v1817 = vpop.trf.xlu0
      %v1818 = vpop.trf.xlu0
      %v1819 = vpop.trf.xlu0
      %v1820 = vpop.trf.xlu0
      %v1821 = vpop.trf.xlu0
      %1822 = vst.msk [vmem:[#allocation10] sm:$0xff] %vm124, %v1806
      %v1823 = vld [vmem:[#allocation3] sm:$0xff]
      %1824 = vst.msk [vmem:[%s3] sm:$0xff] %vm1047, %v1823
      %v1825 = vld [vmem:[#allocation4] sm:$0xff]
      %1826 = vst.msk [vmem:[%s4] sm:$0xff] %vm1047, %v1825
    $region25: #{tpu_custom_call.1} parent=1 // pred_fallthru
      _
    // Predicated region
    $region26: #{tpu_custom_call.1} parent=1 // pred_check
      _
    $region27: #{tpu_custom_call.1} parent=1 // pred_check_branch
      %1828 = sbr.rel (0) target = $region29
    $region28: #{tpu_custom_call.1} parent=1 // pred_region
      %s1830 = ssub.s32 128, 128
      %1831 = vsyncadd [#allocation7], %s1830
      %s1833 = sshll.u32 [#allocation10], 4
      %s1834 = int_to_ptr.vmem [resolvable:$true] %s1833
      %1836 = dma.vmem_to_hbm [thread:$0]  %s1834, 128, %s2, [#allocation7]
    $region29: #{tpu_custom_call.1} parent=1 // pred_fallthru
      _
    // Predicated region
    $region30: #{tpu_custom_call.1} parent=1 // pred_check
      _
    $region31: #{tpu_custom_call.1} parent=1 // pred_check_branch
      %1838 = sbr.rel (0) target = $region33
    $region32: #{tpu_custom_call.1} parent=1 // pred_region
      _
    $region33: #{tpu_custom_call.1} parent=1 // pred_fallthru
      _
    // Predicated region
    $region34: #{tpu_custom_call.1} parent=1 // pred_check
      _
    $region35: #{tpu_custom_call.1} parent=1 // pred_check_branch
      %1840 = sbr.rel (0) target = $region37
    $region36: #{tpu_custom_call.1} parent=1 // pred_region
      _
    $region37: #{tpu_custom_call.1} parent=1 // pred_fallthru
      _
    // Predicated region
    $region38: #{tpu_custom_call.1} parent=1 // pred_check
      _
    $region39: #{tpu_custom_call.1} parent=1 // pred_check_branch
      %1842 = sbr.rel (0) target = $region41
    $region40: #{tpu_custom_call.1} parent=1 // pred_region
      %1843 = dma.done [#allocation7], 128
    $region41: #{tpu_custom_call.1} parent=1 // pred_fallthru
      _
    // Predicated region
    $region42: #{tpu_custom_call.1} parent=1 // pred_check
      _
    $region43: #{tpu_custom_call.1} parent=1 // pred_check_branch
      %1845 = sbr.rel (0) target = $region45
    $region44: #{tpu_custom_call.1} parent=1 // pred_region
      _
    $region45: #{tpu_custom_call.1} parent=1 // pred_fallthru
      _
    // Predicated region
    $region46: #{tpu_custom_call.1} parent=1 // pred_check
      _
    $region47: #{tpu_custom_call.1} parent=1 // pred_check_branch
      %1847 = sbr.rel (0) target = $region49
    $region48: #{tpu_custom_call.1} parent=1 // pred_region
      _
    $region49: #{tpu_custom_call.1} parent=1 // pred_fallthru
      _
    %1848 = vsyncpa [#allocation6], 1
    %1849 = vsyncpa [#allocation9], 1
    %1850 = vsyncpa [#allocation7], 1

</llo_original>
